<compile_context>
chip_gen: v5e
topology: v5e:2x2
jax: 0.10.0
libtpu: 0.0.40
codegen_flags: <defaults>
</compile_context>

<pallas_src>
import functools
import math

import numpy as np
import jax
import jax.numpy as jnp
from jax.experimental import pallas as pl
from jax.experimental.pallas import tpu as pltpu


# ---------------------------------------------------------------------------
# Pass 1: all conv branches (in-kernel tap generation) + per-batch BN stats
# ---------------------------------------------------------------------------
def _make_conv_stats_kernel(branch_meta, h, w, pmax):
    hw = h * w
    n_branches = len(branch_meta)
    # distinct horizontal shifts that need a column-validity mask
    shifts = sorted({kw - kk // 2 for kk, _ in branch_meta
                     for kw in range(kk) if kw - kk // 2 != 0})

    def kernel(xp_ref, *rest):
        w_refs = rest[:n_branches]
        y_ref, stats_ref = rest[n_branches], rest[n_branches + 1]

        masks = {}
        if shifts:
            col = jax.lax.broadcasted_iota(jnp.int32, (1, hw), 1) % w
            for d in shifts:
                masks[d] = (col + d >= 0) & (col + d < w)

        outs = []
        for (kk, cg), w_ref in zip(branch_meta, w_refs):
            pad_b = kk // 2
            acc = jnp.zeros((cg, hw), jnp.float32)
            t = 0
            for kh in range(kk):
                for kw_i in range(kk):
                    d = kw_i - pad_b
                    start = pmax + (pmax - pad_b + kh) * w + d
                    tap = xp_ref[0, :, start:start + hw]          # (C1, HW) bf16
                    if d != 0:
                        tap = jnp.where(masks[d], tap, jnp.zeros_like(tap))
                    acc = acc + jnp.dot(w_ref[t], tap,
                                        preferred_element_type=jnp.float32)
                    t += 1
            outs.append(acc)

        y = outs[0] if len(outs) == 1 else jnp.concatenate(outs, axis=0)  # (C2,HW) f32
        stats_ref[0, :, 0:1] = jnp.sum(y, axis=1, keepdims=True)
        stats_ref[0, :, 1:2] = jnp.sum(y * y, axis=1, keepdims=True)
        y_ref[0, :, :] = y.astype(y_ref.dtype)

    return kernel


# ---------------------------------------------------------------------------
# Pass 2: elementwise BatchNorm (folded scale/shift) + SiLU
# ---------------------------------------------------------------------------
def _bn_silu_kernel(y_ref, scale_ref, shift_ref, out_ref):
    y = y_ref[...].astype(jnp.float32)                 # (1, C2, HW)
    yn = y * scale_ref[...] + shift_ref[...]           # broadcast (1, C2, 1)
    out_ref[...] = (yn * jax.nn.sigmoid(yn)).astype(out_ref.dtype)


# ---------------------------------------------------------------------------
# Jitted wrapper
# ---------------------------------------------------------------------------
@functools.partial(jax.jit, static_argnames=("branch_meta", "kmax", "eps"))
def mixconv_forward(x, ws, gamma, beta, *, branch_meta, kmax, eps):
    B, C1, H, W = x.shape
    C2 = gamma.shape[0]
    HW = H * W
    p = kmax // 2
    Lp = (H + 2 * p) * W + 2 * p

    # Layout plumbing (~1x input bytes): pad H with zeros, flatten H*W, pad ends.
    xb = x.astype(jnp.bfloat16)
    xp = jnp.pad(xb, ((0, 0), (0, 0), (p, p), (0, 0))).reshape(B, C1, (H + 2 * p) * W)
    xp = jnp.pad(xp, ((0, 0), (0, 0), (p, p)))          # (B, C1, Lp)

    w_bytes = sum(int(np.prod(wa.shape)) * 2 for wa in ws)
    flops1 = int(2 * B * HW * C1 * sum(cg * kk * kk for kk, cg in branch_meta))
    bytes1 = int(B * C1 * Lp * 2 + B * C2 * HW * 2 + B * C2 * 2 * 4 + w_bytes)

    step_bytes = 2 * (C1 * Lp * 2 + C2 * HW * 2 + w_bytes) + 6 * C2 * HW * 4
    vmem_limit = int(min(48 * 2 ** 20, max(32 * 2 ** 20, 4 * step_bytes)))
    cparams = pltpu.CompilerParams(dimension_semantics=("parallel",),
                                   vmem_limit_bytes=vmem_limit)

    conv_kernel = _make_conv_stats_kernel(branch_meta, H, W, p)
    y, stats = pl.pallas_call(
        conv_kernel,
        out_shape=(jax.ShapeDtypeStruct((B, C2, HW), jnp.bfloat16),
                   jax.ShapeDtypeStruct((B, C2, 2), jnp.float32)),
        grid=(B,),
        in_specs=[pl.BlockSpec((1, C1, Lp), lambda b: (b, 0, 0))]
                + [pl.BlockSpec(wa.shape, lambda b: (0, 0, 0)) for wa in ws],
        out_specs=(pl.BlockSpec((1, C2, HW), lambda b: (b, 0, 0)),
                   pl.BlockSpec((1, C2, 2), lambda b: (b, 0, 0))),
        compiler_params=cparams,
        cost_estimate=pl.CostEstimate(flops=flops1, transcendentals=0,
                                      bytes_accessed=bytes1),
    )(xp, *ws)

    # Fold batch statistics (tiny (B,C2,2) reduction) into per-channel scale/shift.
    # TODO(synk): BN running-stat (momentum) bookkeeping is not tracked; output
    # uses training-mode batch statistics, matching a fresh PyTorch module.
    n = B * HW
    mean = stats[:, :, 0].sum(axis=0) / n
    var = jnp.maximum(stats[:, :, 1].sum(axis=0) / n - mean * mean, 0.0)
    inv = jax.lax.rsqrt(var + eps)
    scale_v = gamma * inv
    shift_v = beta - mean * scale_v
    scale = scale_v.reshape(1, C2, 1).astype(jnp.float32)
    shift = shift_v.reshape(1, C2, 1).astype(jnp.float32)

    out_itemsize = jnp.dtype(x.dtype).itemsize
    bytes2 = int(B * C2 * HW * (2 + out_itemsize) + 2 * C2 * 4)
    out = pl.pallas_call(
        _bn_silu_kernel,
        out_shape=jax.ShapeDtypeStruct((B, C2, HW), x.dtype),
        grid=(B,),
        in_specs=[pl.BlockSpec((1, C2, HW), lambda b: (b, 0, 0)),
                  pl.BlockSpec((1, C2, 1), lambda b: (0, 0, 0)),
                  pl.BlockSpec((1, C2, 1), lambda b: (0, 0, 0))],
        out_specs=pl.BlockSpec((1, C2, HW), lambda b: (b, 0, 0)),
        compiler_params=cparams,
        cost_estimate=pl.CostEstimate(flops=5 * B * C2 * HW,
                                      transcendentals=B * C2 * HW,
                                      bytes_accessed=bytes2),
    )(y, scale, shift)

    # TODO(synk): writing NCHW directly would force W-wide (<128) lane stores;
    # we keep lane-dense (C2, H*W) stores and reshape here instead.
    return out.reshape(B, C2, H, W)


# ---------------------------------------------------------------------------
# Module wrapper mirroring the PyTorch MixConv2d
# ---------------------------------------------------------------------------
class MixConv2d:
    """JAX/Pallas port of MixConv2d (stride 1, odd kernel sizes)."""

    def __init__(self, c1, c2, k=(1, 3), s=1, equal_ch=True, *, key, eps=1e-5):
        # TODO(synk): stride != 1 and even kernel sizes are not supported.
        assert s == 1, "only stride 1 supported"
        assert all(int(kk) % 2 == 1 for kk in k), "only odd kernel sizes supported"

        n = len(k)
        if equal_ch:  # equal channels per group (same formula as PyTorch ref)
            i = np.floor(np.linspace(0, n - 1e-6, c2))
            c_ = [int((i == g).sum()) for g in range(n)]
        else:         # equal weight.numel() per group
            b = [c2] + [0] * n
            a = np.eye(n + 1, n, k=-1)
            a -= np.roll(a, 1, axis=1)
            a *= np.array(k) ** 2
            a[0] = 1
            c_ = [int(v) for v in np.linalg.lstsq(a, b, rcond=None)[0].round()]
        assert all(cg > 0 for cg in c_)

        self.c1, self.c2 = c1, c2
        self.k = tuple(int(kk) for kk in k)
        self.c_ = c_
        self.groups = [math.gcd(c1, cg) for cg in c_]
        self.eps = float(eps)
        self.kmax = max(self.k)

        # Per-branch grouped conv weights (PyTorch layout: (c_out, c_in/g, k, k))
        keys = jax.random.split(key, n)
        self.branch_weights = []
        for kk, cg, g, wkey in zip(self.k, c_, self.groups, keys):
            fan_in = (c1 // g) * kk * kk
            bound = 1.0 / math.sqrt(fan_in)
            self.branch_weights.append(
                jax.random.uniform(wkey, (cg, c1 // g, kk, kk), jnp.float32,
                                   -bound, bound))

        # BatchNorm2d default parameters (weight=1, bias=0)
        self.gamma = jnp.ones((c2,), jnp.float32)
        self.beta = jnp.zeros((c2,), jnp.float32)

        # Per-branch per-tap dense (over C1) weights, bf16 for the MXU.
        self.dense_ws = tuple(self._dense_branch_weight(i) for i in range(n))
        self.branch_meta = tuple((kk, cg) for kk, cg in zip(self.k, c_))

    def _dense_branch_weight(self, idx):
        kk, cg, g = self.k[idx], self.c_[idx], self.groups[idx]
        w = np.asarray(self.branch_weights[idx], np.float32)   # (cg, c1/g, kk, kk)
        cin_g, cout_g = self.c1 // g, cg // g
        Wd = np.zeros((cg, self.c1, kk, kk), np.float32)
        for gi in range(g):  # block-diagonal expansion of the grouped conv
            Wd[gi * cout_g:(gi + 1) * cout_g,
               gi * cin_g:(gi + 1) * cin_g] = w[gi * cout_g:(gi + 1) * cout_g]
        # (cg, C1, kk, kk) -> (kk*kk, cg, C1); tap index = kh*kk + kw
        Wt = Wd.transpose(2, 3, 0, 1).reshape(kk * kk, cg, self.c1)
        return jnp.asarray(Wt, jnp.bfloat16)

    def __call__(self, x):
        return mixconv_forward(x, self.dense_ws, self.gamma, self.beta,
                               branch_meta=self.branch_meta, kmax=self.kmax,
                               eps=self.eps)


# ---------------------------------------------------------------------------
# Pure-JAX reference (grouped convs + batch-stat BN + SiLU) for validation
# ---------------------------------------------------------------------------
def mixconv_ref(x, module):
    outs = []
    for kk, g, w in zip(module.k, module.groups, module.branch_weights):
        pad = kk // 2
        y = jax.lax.conv_general_dilated(
            x, w, window_strides=(1, 1),
            padding=((pad, pad), (pad, pad)),
            dimension_numbers=("NCHW", "OIHW", "NCHW"),
            feature_group_count=g,
            precision=jax.lax.Precision.HIGHEST)
        outs.append(y)
    y = jnp.concatenate(outs, axis=1)
    mean = y.mean(axis=(0, 2, 3), keepdims=True)
    var = jnp.mean(jnp.square(y - mean), axis=(0, 2, 3), keepdims=True)
    yn = (y - mean) * jax.lax.rsqrt(var + module.eps) \
        * module.gamma.reshape(1, -1, 1, 1) + module.beta.reshape(1, -1, 1, 1)
    return yn * jax.nn.sigmoid(yn)


# ---------------------------------------------------------------------------
if __name__ == "__main__":
    key = jax.random.PRNGKey(0)
    k_w, k_x = jax.random.split(key)

    # Small shapes consistent with the module: NCHW input, two kernel sizes.
    B, C1, C2, H, W = 2, 16, 16, 16, 16
    model = MixConv2d(C1, C2, k=(1, 3), s=1, equal_ch=True, key=k_w)

    x = jax.random.normal(k_x, (B, C1, H, W), dtype=jnp.float32)

    out = jax.block_until_ready(model(x))

    assert out.shape == (B, C2, H, W)
    assert out.dtype == x.dtype
    assert bool(jnp.all(jnp.isfinite(out)))

    ref = mixconv_ref(x, model)
    err = float(jnp.max(jnp.abs(out - ref)))
    assert err < 5e-2, f"mismatch vs reference: max abs err {err}"

    print("KERNEL_OK")
</pallas_src>

<mosaic_0001>
module attributes {stable_mosaic.version = 11 : i64} {
  func.func @kernel(%arg0: i32, %arg1: memref<1x16x290xbf16, #tpu.memory_space<vmem>>, %arg2: memref<1x8x16xbf16, #tpu.memory_space<vmem>>, %arg3: memref<9x8x16xbf16, #tpu.memory_space<vmem>>, %arg4: memref<1x16x256xbf16, #tpu.memory_space<vmem>>, %arg5: memref<1x16x2xf32, #tpu.memory_space<vmem>>) attributes {dimension_semantics = [#tpu.dimension_semantics<parallel>], iteration_bounds = array<i64: 2>, scalar_prefetch = 0 : i64, scratch_operands = 0 : i64, tpu.core_type = #tpu.core_type<tc>, window_params = [{transform_indices = @transform_0, window_bounds = array<i64: 1, 16, 290>}, {pipeline_mode = #tpu.pipeline_mode<synchronous>, transform_indices = @transform_1, window_bounds = array<i64: 1, 8, 16>}, {pipeline_mode = #tpu.pipeline_mode<synchronous>, transform_indices = @transform_2, window_bounds = array<i64: 9, 8, 16>}, {transform_indices = @transform_3, window_bounds = array<i64: 1, 16, 256>}, {transform_indices = @transform_4, window_bounds = array<i64: 1, 16, 2>}]} {
    %0 = tpu.iota {dimensions = array<i32: 1>} : vector<1x256xi32>
    %c16_i32 = arith.constant 16 : i32
    %c0_i32 = arith.constant 0 : i32
    %1 = arith.cmpi eq, %c16_i32, %c0_i32 : i32
    %c1_i32 = arith.constant 1 : i32
    %2 = arith.select %1, %c1_i32, %c16_i32 : i32
    %3 = vector.broadcast %2 : i32 to vector<1x256xi32>
    %4 = arith.remsi %0, %3 : vector<1x256xi32>
    %c0_i32_0 = arith.constant 0 : i32
    %5 = vector.broadcast %c0_i32_0 : i32 to vector<1x256xi32>
    %6 = arith.cmpi ne, %4, %5 : vector<1x256xi32>
    %c0_i32_1 = arith.constant 0 : i32
    %7 = vector.broadcast %c0_i32_1 : i32 to vector<1x256xi32>
    %8 = arith.cmpi slt, %4, %7 : vector<1x256xi32>
    %c0_i32_2 = arith.constant 0 : i32
    %9 = arith.cmpi slt, %2, %c0_i32_2 : i32
    %10 = vector.broadcast %9 : i1 to vector<1x256xi1>
    %11 = vector.broadcast %10 : vector<1x256xi1> to vector<1x256xi1>
    %12 = arith.xori %8, %11 : vector<1x256xi1>
    %13 = arith.andi %12, %6 : vector<1x256xi1>
    %14 = vector.broadcast %2 : i32 to vector<1x256xi32>
    %15 = arith.addi %4, %14 : vector<1x256xi32>
    %16 = arith.select %13, %15, %4 : vector<1x256xi1>, vector<1x256xi32>
    %c-1_i32 = arith.constant -1 : i32
    %17 = vector.broadcast %c-1_i32 : i32 to vector<1x256xi32>
    %18 = arith.addi %16, %17 : vector<1x256xi32>
    %c0_i32_3 = arith.constant 0 : i32
    %19 = vector.broadcast %c0_i32_3 : i32 to vector<1x256xi32>
    %20 = arith.cmpi sge, %18, %19 : vector<1x256xi32>
    %c-1_i32_4 = arith.constant -1 : i32
    %21 = vector.broadcast %c-1_i32_4 : i32 to vector<1x256xi32>
    %22 = arith.addi %16, %21 : vector<1x256xi32>
    %c16_i32_5 = arith.constant 16 : i32
    %23 = vector.broadcast %c16_i32_5 : i32 to vector<1x256xi32>
    %24 = arith.cmpi slt, %22, %23 : vector<1x256xi32>
    %25 = arith.andi %20, %24 : vector<1x256xi1>
    %c1_i32_6 = arith.constant 1 : i32
    %26 = vector.broadcast %c1_i32_6 : i32 to vector<1x256xi32>
    %27 = arith.addi %16, %26 : vector<1x256xi32>
    %c0_i32_7 = arith.constant 0 : i32
    %28 = vector.broadcast %c0_i32_7 : i32 to vector<1x256xi32>
    %29 = arith.cmpi sge, %27, %28 : vector<1x256xi32>
    %c1_i32_8 = arith.constant 1 : i32
    %30 = vector.broadcast %c1_i32_8 : i32 to vector<1x256xi32>
    %31 = arith.addi %16, %30 : vector<1x256xi32>
    %c16_i32_9 = arith.constant 16 : i32
    %32 = vector.broadcast %c16_i32_9 : i32 to vector<1x256xi32>
    %33 = arith.cmpi slt, %31, %32 : vector<1x256xi32>
    %34 = arith.andi %29, %33 : vector<1x256xi1>
    %cst = arith.constant 0.000000e+00 : f32
    %35 = vector.broadcast %cst : f32 to vector<8x256xf32>
    %c0 = arith.constant 0 : index
    %c0_10 = arith.constant 0 : index
    %c17 = arith.constant 17 : index
    %36 = vector.load %arg1[%c0, %c0_10, %c17] : memref<1x16x290xbf16, #tpu.memory_space<vmem>>, vector<1x16x256xbf16>
    %37 = vector.shape_cast %36 : vector<1x16x256xbf16> to vector<16x256xbf16>
    %c0_11 = arith.constant 0 : index
    %c0_12 = arith.constant 0 : index
    %c0_13 = arith.constant 0 : index
    %38 = vector.load %arg2[%c0_11, %c0_12, %c0_13] : memref<1x8x16xbf16, #tpu.memory_space<vmem>>, vector<1x8x16xbf16>
    %39 = vector.shape_cast %38 : vector<1x8x16xbf16> to vector<8x16xbf16>
    %cst_14 = arith.constant dense<0.000000e+00> : vector<8x256xf32>
    %40 = tpu.matmul %39, %37, %cst_14 {dimension_numbers = #tpu.dot_dimension_numbers<[1], [0], [0], [1], [0, 0, 1, 1], [], []>} : vector<8x16xbf16>, vector<16x256xbf16>, vector<8x256xf32> -> vector<8x256xf32>
    %41 = arith.addf %35, %40 : vector<8x256xf32>
    %cst_15 = arith.constant 0.000000e+00 : f32
    %42 = vector.broadcast %cst_15 : f32 to vector<8x256xf32>
    %c0_16 = arith.constant 0 : index
    %c0_17 = arith.constant 0 : index
    %c0_18 = arith.constant 0 : index
    %43 = vector.load %arg1[%c0_16, %c0_17, %c0_18] : memref<1x16x290xbf16, #tpu.memory_space<vmem>>, vector<1x16x256xbf16>
    %44 = vector.shape_cast %43 : vector<1x16x256xbf16> to vector<16x256xbf16>
    %cst_19 = arith.constant 0.000000e+00 : bf16
    %45 = vector.broadcast %cst_19 : bf16 to vector<16x256xbf16>
    %46 = vector.shape_cast %25 : vector<1x256xi1> to vector<1x256xi1>
    %47 = vector.broadcast %46 : vector<1x256xi1> to vector<16x256xi1>
    %48 = arith.select %47, %44, %45 : vector<16x256xi1>, vector<16x256xbf16>
    %c0_20 = arith.constant 0 : index
    %c0_21 = arith.constant 0 : index
    %c0_22 = arith.constant 0 : index
    %49 = vector.load %arg3[%c0_20, %c0_21, %c0_22] : memref<9x8x16xbf16, #tpu.memory_space<vmem>>, vector<1x8x16xbf16>
    %50 = vector.shape_cast %49 : vector<1x8x16xbf16> to vector<8x16xbf16>
    %cst_23 = arith.constant dense<0.000000e+00> : vector<8x256xf32>
    %51 = tpu.matmul %50, %48, %cst_23 {dimension_numbers = #tpu.dot_dimension_numbers<[1], [0], [0], [1], [0, 0, 1, 1], [], []>} : vector<8x16xbf16>, vector<16x256xbf16>, vector<8x256xf32> -> vector<8x256xf32>
    %52 = arith.addf %42, %51 : vector<8x256xf32>
    %c0_24 = arith.constant 0 : index
    %c0_25 = arith.constant 0 : index
    %c1 = arith.constant 1 : index
    %53 = vector.load %arg1[%c0_24, %c0_25, %c1] : memref<1x16x290xbf16, #tpu.memory_space<vmem>>, vector<1x16x256xbf16>
    %54 = vector.shape_cast %53 : vector<1x16x256xbf16> to vector<16x256xbf16>
    %c1_26 = arith.constant 1 : index
    %c0_27 = arith.constant 0 : index
    %c0_28 = arith.constant 0 : index
    %55 = vector.load %arg3[%c1_26, %c0_27, %c0_28] : memref<9x8x16xbf16, #tpu.memory_space<vmem>>, vector<1x8x16xbf16>
    %56 = vector.shape_cast %55 : vector<1x8x16xbf16> to vector<8x16xbf16>
    %cst_29 = arith.constant dense<0.000000e+00> : vector<8x256xf32>
    %57 = tpu.matmul %56, %54, %cst_29 {dimension_numbers = #tpu.dot_dimension_numbers<[1], [0], [0], [1], [0, 0, 1, 1], [], []>} : vector<8x16xbf16>, vector<16x256xbf16>, vector<8x256xf32> -> vector<8x256xf32>
    %58 = arith.addf %52, %57 : vector<8x256xf32>
    %c0_30 = arith.constant 0 : index
    %c0_31 = arith.constant 0 : index
    %c2 = arith.constant 2 : index
    %59 = vector.load %arg1[%c0_30, %c0_31, %c2] : memref<1x16x290xbf16, #tpu.memory_space<vmem>>, vector<1x16x256xbf16>
    %60 = vector.shape_cast %59 : vector<1x16x256xbf16> to vector<16x256xbf16>
    %cst_32 = arith.constant 0.000000e+00 : bf16
    %61 = vector.broadcast %cst_32 : bf16 to vector<16x256xbf16>
    %62 = vector.shape_cast %34 : vector<1x256xi1> to vector<1x256xi1>
    %63 = vector.broadcast %62 : vector<1x256xi1> to vector<16x256xi1>
    %64 = arith.select %63, %60, %61 : vector<16x256xi1>, vector<16x256xbf16>
    %c2_33 = arith.constant 2 : index
    %c0_34 = arith.constant 0 : index
    %c0_35 = arith.constant 0 : index
    %65 = vector.load %arg3[%c2_33, %c0_34, %c0_35] : memref<9x8x16xbf16, #tpu.memory_space<vmem>>, vector<1x8x16xbf16>
    %66 = vector.shape_cast %65 : vector<1x8x16xbf16> to vector<8x16xbf16>
    %cst_36 = arith.constant dense<0.000000e+00> : vector<8x256xf32>
    %67 = tpu.matmul %66, %64, %cst_36 {dimension_numbers = #tpu.dot_dimension_numbers<[1], [0], [0], [1], [0, 0, 1, 1], [], []>} : vector<8x16xbf16>, vector<16x256xbf16>, vector<8x256xf32> -> vector<8x256xf32>
    %68 = arith.addf %58, %67 : vector<8x256xf32>
    %c0_37 = arith.constant 0 : index
    %c0_38 = arith.constant 0 : index
    %c16 = arith.constant 16 : index
    %69 = vector.load %arg1[%c0_37, %c0_38, %c16] : memref<1x16x290xbf16, #tpu.memory_space<vmem>>, vector<1x16x256xbf16>
    %70 = vector.shape_cast %69 : vector<1x16x256xbf16> to vector<16x256xbf16>
    %cst_39 = arith.constant 0.000000e+00 : bf16
    %71 = vector.broadcast %cst_39 : bf16 to vector<16x256xbf16>
    %72 = vector.shape_cast %25 : vector<1x256xi1> to vector<1x256xi1>
    %73 = vector.broadcast %72 : vector<1x256xi1> to vector<16x256xi1>
    %74 = arith.select %73, %70, %71 : vector<16x256xi1>, vector<16x256xbf16>
    %c3 = arith.constant 3 : index
    %c0_40 = arith.constant 0 : index
    %c0_41 = arith.constant 0 : index
    %75 = vector.load %arg3[%c3, %c0_40, %c0_41] : memref<9x8x16xbf16, #tpu.memory_space<vmem>>, vector<1x8x16xbf16>
    %76 = vector.shape_cast %75 : vector<1x8x16xbf16> to vector<8x16xbf16>
    %cst_42 = arith.constant dense<0.000000e+00> : vector<8x256xf32>
    %77 = tpu.matmul %76, %74, %cst_42 {dimension_numbers = #tpu.dot_dimension_numbers<[1], [0], [0], [1], [0, 0, 1, 1], [], []>} : vector<8x16xbf16>, vector<16x256xbf16>, vector<8x256xf32> -> vector<8x256xf32>
    %78 = arith.addf %68, %77 : vector<8x256xf32>
    %c0_43 = arith.constant 0 : index
    %c0_44 = arith.constant 0 : index
    %c17_45 = arith.constant 17 : index
    %79 = vector.load %arg1[%c0_43, %c0_44, %c17_45] : memref<1x16x290xbf16, #tpu.memory_space<vmem>>, vector<1x16x256xbf16>
    %80 = vector.shape_cast %79 : vector<1x16x256xbf16> to vector<16x256xbf16>
    %c4 = arith.constant 4 : index
    %c0_46 = arith.constant 0 : index
    %c0_47 = arith.constant 0 : index
    %81 = vector.load %arg3[%c4, %c0_46, %c0_47] : memref<9x8x16xbf16, #tpu.memory_space<vmem>>, vector<1x8x16xbf16>
    %82 = vector.shape_cast %81 : vector<1x8x16xbf16> to vector<8x16xbf16>
    %cst_48 = arith.constant dense<0.000000e+00> : vector<8x256xf32>
    %83 = tpu.matmul %82, %80, %cst_48 {dimension_numbers = #tpu.dot_dimension_numbers<[1], [0], [0], [1], [0, 0, 1, 1], [], []>} : vector<8x16xbf16>, vector<16x256xbf16>, vector<8x256xf32> -> vector<8x256xf32>
    %84 = arith.addf %78, %83 : vector<8x256xf32>
    %c0_49 = arith.constant 0 : index
    %c0_50 = arith.constant 0 : index
    %c18 = arith.constant 18 : index
    %85 = vector.load %arg1[%c0_49, %c0_50, %c18] : memref<1x16x290xbf16, #tpu.memory_space<vmem>>, vector<1x16x256xbf16>
    %86 = vector.shape_cast %85 : vector<1x16x256xbf16> to vector<16x256xbf16>
    %cst_51 = arith.constant 0.000000e+00 : bf16
    %87 = vector.broadcast %cst_51 : bf16 to vector<16x256xbf16>
    %88 = vector.shape_cast %34 : vector<1x256xi1> to vector<1x256xi1>
    %89 = vector.broadcast %88 : vector<1x256xi1> to vector<16x256xi1>
    %90 = arith.select %89, %86, %87 : vector<16x256xi1>, vector<16x256xbf16>
    %c5 = arith.constant 5 : index
    %c0_52 = arith.constant 0 : index
    %c0_53 = arith.constant 0 : index
    %91 = vector.load %arg3[%c5, %c0_52, %c0_53] : memref<9x8x16xbf16, #tpu.memory_space<vmem>>, vector<1x8x16xbf16>
    %92 = vector.shape_cast %91 : vector<1x8x16xbf16> to vector<8x16xbf16>
    %cst_54 = arith.constant dense<0.000000e+00> : vector<8x256xf32>
    %93 = tpu.matmul %92, %90, %cst_54 {dimension_numbers = #tpu.dot_dimension_numbers<[1], [0], [0], [1], [0, 0, 1, 1], [], []>} : vector<8x16xbf16>, vector<16x256xbf16>, vector<8x256xf32> -> vector<8x256xf32>
    %94 = arith.addf %84, %93 : vector<8x256xf32>
    %c0_55 = arith.constant 0 : index
    %c0_56 = arith.constant 0 : index
    %c32 = arith.constant 32 : index
    %95 = vector.load %arg1[%c0_55, %c0_56, %c32] : memref<1x16x290xbf16, #tpu.memory_space<vmem>>, vector<1x16x256xbf16>
    %96 = vector.shape_cast %95 : vector<1x16x256xbf16> to vector<16x256xbf16>
    %cst_57 = arith.constant 0.000000e+00 : bf16
    %97 = vector.broadcast %cst_57 : bf16 to vector<16x256xbf16>
    %98 = vector.shape_cast %25 : vector<1x256xi1> to vector<1x256xi1>
    %99 = vector.broadcast %98 : vector<1x256xi1> to vector<16x256xi1>
    %100 = arith.select %99, %96, %97 : vector<16x256xi1>, vector<16x256xbf16>
    %c6 = arith.constant 6 : index
    %c0_58 = arith.constant 0 : index
    %c0_59 = arith.constant 0 : index
    %101 = vector.load %arg3[%c6, %c0_58, %c0_59] : memref<9x8x16xbf16, #tpu.memory_space<vmem>>, vector<1x8x16xbf16>
    %102 = vector.shape_cast %101 : vector<1x8x16xbf16> to vector<8x16xbf16>
    %cst_60 = arith.constant dense<0.000000e+00> : vector<8x256xf32>
    %103 = tpu.matmul %102, %100, %cst_60 {dimension_numbers = #tpu.dot_dimension_numbers<[1], [0], [0], [1], [0, 0, 1, 1], [], []>} : vector<8x16xbf16>, vector<16x256xbf16>, vector<8x256xf32> -> vector<8x256xf32>
    %104 = arith.addf %94, %103 : vector<8x256xf32>
    %c0_61 = arith.constant 0 : index
    %c0_62 = arith.constant 0 : index
    %c33 = arith.constant 33 : index
    %105 = vector.load %arg1[%c0_61, %c0_62, %c33] : memref<1x16x290xbf16, #tpu.memory_space<vmem>>, vector<1x16x256xbf16>
    %106 = vector.shape_cast %105 : vector<1x16x256xbf16> to vector<16x256xbf16>
    %c7 = arith.constant 7 : index
    %c0_63 = arith.constant 0 : index
    %c0_64 = arith.constant 0 : index
    %107 = vector.load %arg3[%c7, %c0_63, %c0_64] : memref<9x8x16xbf16, #tpu.memory_space<vmem>>, vector<1x8x16xbf16>
    %108 = vector.shape_cast %107 : vector<1x8x16xbf16> to vector<8x16xbf16>
    %cst_65 = arith.constant dense<0.000000e+00> : vector<8x256xf32>
    %109 = tpu.matmul %108, %106, %cst_65 {dimension_numbers = #tpu.dot_dimension_numbers<[1], [0], [0], [1], [0, 0, 1, 1], [], []>} : vector<8x16xbf16>, vector<16x256xbf16>, vector<8x256xf32> -> vector<8x256xf32>
    %110 = arith.addf %104, %109 : vector<8x256xf32>
    %c0_66 = arith.constant 0 : index
    %c0_67 = arith.constant 0 : index
    %c34 = arith.constant 34 : index
    %111 = vector.load %arg1[%c0_66, %c0_67, %c34] : memref<1x16x290xbf16, #tpu.memory_space<vmem>>, vector<1x16x256xbf16>
    %112 = vector.shape_cast %111 : vector<1x16x256xbf16> to vector<16x256xbf16>
    %cst_68 = arith.constant 0.000000e+00 : bf16
    %113 = vector.broadcast %cst_68 : bf16 to vector<16x256xbf16>
    %114 = vector.shape_cast %34 : vector<1x256xi1> to vector<1x256xi1>
    %115 = vector.broadcast %114 : vector<1x256xi1> to vector<16x256xi1>
    %116 = arith.select %115, %112, %113 : vector<16x256xi1>, vector<16x256xbf16>
    %c8 = arith.constant 8 : index
    %c0_69 = arith.constant 0 : index
    %c0_70 = arith.constant 0 : index
    %117 = vector.load %arg3[%c8, %c0_69, %c0_70] : memref<9x8x16xbf16, #tpu.memory_space<vmem>>, vector<1x8x16xbf16>
    %118 = vector.shape_cast %117 : vector<1x8x16xbf16> to vector<8x16xbf16>
    %cst_71 = arith.constant dense<0.000000e+00> : vector<8x256xf32>
    %119 = tpu.matmul %118, %116, %cst_71 {dimension_numbers = #tpu.dot_dimension_numbers<[1], [0], [0], [1], [0, 0, 1, 1], [], []>} : vector<8x16xbf16>, vector<16x256xbf16>, vector<8x256xf32> -> vector<8x256xf32>
    %120 = arith.addf %110, %119 : vector<8x256xf32>
    %121 = tpu.concatenate %41, %120 in 0 : vector<8x256xf32>, vector<8x256xf32> -> vector<16x256xf32>
    %cst_72 = arith.constant dense<0.000000e+00> : vector<16xf32>
    %122 = vector.multi_reduction <add>, %121, %cst_72 [1] : vector<16x256xf32> to vector<16xf32>
    %123 = vector.shape_cast %122 : vector<16xf32> to vector<16x1xf32>
    %c0_73 = arith.constant 0 : index
    %c0_74 = arith.constant 0 : index
    %c0_75 = arith.constant 0 : index
    %124 = vector.load %arg5[%c0_73, %c0_74, %c0_75] : memref<1x16x2xf32, #tpu.memory_space<vmem>>, vector<1x16x1xf32>
    %125 = vector.shape_cast %124 : vector<1x16x1xf32> to vector<16x1xf32>
    %126 = vector.shape_cast %123 : vector<16x1xf32> to vector<1x16x1xf32>
    tpu.vector_store %arg5[%c0_73, %c0_74, %c0_75], %126 {strides = array<i32>} : memref<1x16x2xf32, #tpu.memory_space<vmem>>, vector<1x16x1xf32>,
    %127 = arith.mulf %121, %121 : vector<16x256xf32>
    %cst_76 = arith.constant dense<0.000000e+00> : vector<16xf32>
    %128 = vector.multi_reduction <add>, %127, %cst_76 [1] : vector<16x256xf32> to vector<16xf32>
    %129 = vector.shape_cast %128 : vector<16xf32> to vector<16x1xf32>
    %c0_77 = arith.constant 0 : index
    %c0_78 = arith.constant 0 : index
    %c1_79 = arith.constant 1 : index
    %130 = vector.load %arg5[%c0_77, %c0_78, %c1_79] : memref<1x16x2xf32, #tpu.memory_space<vmem>>, vector<1x16x1xf32>
    %131 = vector.shape_cast %130 : vector<1x16x1xf32> to vector<16x1xf32>
    %132 = vector.shape_cast %129 : vector<16x1xf32> to vector<1x16x1xf32>
    tpu.vector_store %arg5[%c0_77, %c0_78, %c1_79], %132 {strides = array<i32>} : memref<1x16x2xf32, #tpu.memory_space<vmem>>, vector<1x16x1xf32>,
    %133 = arith.truncf %121 : vector<16x256xf32> to vector<16x256xbf16>
    %c0_80 = arith.constant 0 : index
    %c0_81 = arith.constant 0 : index
    %c0_82 = arith.constant 0 : index
    %134 = vector.load %arg4[%c0_80, %c0_81, %c0_82] : memref<1x16x256xbf16, #tpu.memory_space<vmem>>, vector<1x16x256xbf16>
    %135 = vector.shape_cast %134 : vector<1x16x256xbf16> to vector<16x256xbf16>
    %136 = vector.shape_cast %133 : vector<16x256xbf16> to vector<1x16x256xbf16>
    tpu.vector_store %arg4[%c0_80, %c0_81, %c0_82], %136 {strides = array<i32>} : memref<1x16x256xbf16, #tpu.memory_space<vmem>>, vector<1x16x256xbf16>,
    return
  }
  func.func @transform_0(%arg0: i32) -> (i32, i32, i32) {
    %c0_i32 = arith.constant 0 : i32
    %c0_i32_0 = arith.constant 0 : i32
    %c0_i32_1 = arith.constant 0 : i32
    return %arg0, %c0_i32, %c0_i32_0 : i32, i32, i32
  }
  func.func @transform_1(%arg0: i32) -> (i32, i32, i32) {
    %c0_i32 = arith.constant 0 : i32
    %c0_i32_0 = arith.constant 0 : i32
    %c0_i32_1 = arith.constant 0 : i32
    %c0_i32_2 = arith.constant 0 : i32
    return %c0_i32, %c0_i32_0, %c0_i32_1 : i32, i32, i32
  }
  func.func @transform_2(%arg0: i32) -> (i32, i32, i32) {
    %c0_i32 = arith.constant 0 : i32
    %c0_i32_0 = arith.constant 0 : i32
    %c0_i32_1 = arith.constant 0 : i32
    %c0_i32_2 = arith.constant 0 : i32
    return %c0_i32, %c0_i32_0, %c0_i32_1 : i32, i32, i32
  }
  func.func @transform_3(%arg0: i32) -> (i32, i32, i32) {
    %c0_i32 = arith.constant 0 : i32
    %c0_i32_0 = arith.constant 0 : i32
    %c0_i32_1 = arith.constant 0 : i32
    return %arg0, %c0_i32, %c0_i32_0 : i32, i32, i32
  }
  func.func @transform_4(%arg0: i32) -> (i32, i32, i32) {
    %c0_i32 = arith.constant 0 : i32
    %c0_i32_0 = arith.constant 0 : i32
    %c0_i32_1 = arith.constant 0 : i32
    return %arg0, %c0_i32, %c0_i32_0 : i32, i32, i32
  }
}

module attributes {stable_mosaic.version = 11 : i64} {
  func.func @_bn_silu_kernel(%arg0: i32, %arg1: memref<1x16x256xbf16, #tpu.memory_space<vmem>>, %arg2: memref<1x16x1xf32, #tpu.memory_space<vmem>>, %arg3: memref<1x16x1xf32, #tpu.memory_space<vmem>>, %arg4: memref<1x16x256xf32, #tpu.memory_space<vmem>>) attributes {dimension_semantics = [#tpu.dimension_semantics<parallel>], iteration_bounds = array<i64: 2>, scalar_prefetch = 0 : i64, scratch_operands = 0 : i64, tpu.core_type = #tpu.core_type<tc>, window_params = [{transform_indices = @transform_0, window_bounds = array<i64: 1, 16, 256>}, {pipeline_mode = #tpu.pipeline_mode<synchronous>, transform_indices = @transform_1, window_bounds = array<i64: 1, 16, 1>}, {pipeline_mode = #tpu.pipeline_mode<synchronous>, transform_indices = @transform_2, window_bounds = array<i64: 1, 16, 1>}, {transform_indices = @transform_3, window_bounds = array<i64: 1, 16, 256>}]} {
    %c0 = arith.constant 0 : index
    %c0_0 = arith.constant 0 : index
    %c0_1 = arith.constant 0 : index
    %0 = vector.load %arg1[%c0, %c0_0, %c0_1] : memref<1x16x256xbf16, #tpu.memory_space<vmem>>, vector<1x16x256xbf16>
    %1 = arith.extf %0 : vector<1x16x256xbf16> to vector<1x16x256xf32>
    %c0_2 = arith.constant 0 : index
    %c0_3 = arith.constant 0 : index
    %c0_4 = arith.constant 0 : index
    %2 = vector.load %arg2[%c0_2, %c0_3, %c0_4] : memref<1x16x1xf32, #tpu.memory_space<vmem>>, vector<1x16x1xf32>
    %3 = vector.broadcast %2 : vector<1x16x1xf32> to vector<1x16x256xf32>
    %4 = arith.mulf %1, %3 : vector<1x16x256xf32>
    %c0_5 = arith.constant 0 : index
    %c0_6 = arith.constant 0 : index
    %c0_7 = arith.constant 0 : index
    %5 = vector.load %arg3[%c0_5, %c0_6, %c0_7] : memref<1x16x1xf32, #tpu.memory_space<vmem>>, vector<1x16x1xf32>
    %6 = vector.broadcast %5 : vector<1x16x1xf32> to vector<1x16x256xf32>
    %7 = arith.addf %4, %6 : vector<1x16x256xf32>
    %8 = arith.negf %7 : vector<1x16x256xf32>
    %9 = math.exp %8 : vector<1x16x256xf32>
    %cst = arith.constant 1.000000e+00 : f32
    %10 = vector.broadcast %cst : f32 to vector<1x16x256xf32>
    %11 = arith.addf %10, %9 : vector<1x16x256xf32>
    %12 = arith.divf %10, %11 : vector<1x16x256xf32>
    %13 = arith.mulf %7, %12 : vector<1x16x256xf32>
    %c0_8 = arith.constant 0 : index
    %c0_9 = arith.constant 0 : index
    %c0_10 = arith.constant 0 : index
    %14 = vector.load %arg4[%c0_8, %c0_9, %c0_10] : memref<1x16x256xf32, #tpu.memory_space<vmem>>, vector<1x16x256xf32>
    tpu.vector_store %arg4[%c0_8, %c0_9, %c0_10], %13 {strides = array<i32>} : memref<1x16x256xf32, #tpu.memory_space<vmem>>, vector<1x16x256xf32>,
    return
  }
  func.func @transform_0(%arg0: i32) -> (i32, i32, i32) {
    %c0_i32 = arith.constant 0 : i32
    %c0_i32_0 = arith.constant 0 : i32
    %c0_i32_1 = arith.constant 0 : i32
    return %arg0, %c0_i32, %c0_i32_0 : i32, i32, i32
  }
  func.func @transform_1(%arg0: i32) -> (i32, i32, i32) {
    %c0_i32 = arith.constant 0 : i32
    %c0_i32_0 = arith.constant 0 : i32
    %c0_i32_1 = arith.constant 0 : i32
    %c0_i32_2 = arith.constant 0 : i32
    return %c0_i32, %c0_i32_0, %c0_i32_1 : i32, i32, i32
  }
  func.func @transform_2(%arg0: i32) -> (i32, i32, i32) {
    %c0_i32 = arith.constant 0 : i32
    %c0_i32_0 = arith.constant 0 : i32
    %c0_i32_1 = arith.constant 0 : i32
    %c0_i32_2 = arith.constant 0 : i32
    return %c0_i32, %c0_i32_0, %c0_i32_1 : i32, i32, i32
  }
  func.func @transform_3(%arg0: i32) -> (i32, i32, i32) {
    %c0_i32 = arith.constant 0 : i32
    %c0_i32_0 = arith.constant 0 : i32
    %c0_i32_1 = arith.constant 0 : i32
    return %arg0, %c0_i32, %c0_i32_0 : i32, i32, i32
  }
}

</mosaic_0001>

<llo_original>
// kernel: mixconv_forward.3
$region0: #{mixconv_forward.3}
  #allocation0 [shape = 'u32[]', space=smem, size = 0x4, offset = 0x4, fixed_abs, tag = 'smem constant byte address 0x4 - core index']
  #allocation1 [shape = 'u32[72,128]{1,0:T(1,128)}', space=vmem, size = 0x9000, scoped, tag = 'internal scratch']
  %s0 = inlined_call_operand.vmem [shape: bf16[2,16,256], index: 0, kind: input, shape index: {}]
  %s1 = inlined_call_operand.vmem [shape: f32[1,16,1], index: 1, kind: input, shape index: {}]
  %s2 = inlined_call_operand.vmem [shape: f32[1,16,1], index: 2, kind: input, shape index: {}]
  %s3 = inlined_call_operand.vmem [shape: f32[2,16,256], index: 3, kind: output, shape index: {}]
  %s4 = sld [smem:[#allocation0]]
  $region45: #{mixconv_forward.3} parent=0
    _
  %s6 = ssub.s32 1, %s4
  %s7 = scalar_select 0, %s6, %s4
  loop: start=0, step=1, limit=4
  $region2: #{mixconv_forward.3} parent=0 // loop_pre_header
    _
  $region3: #{mixconv_forward.3} parent=0 // loop_header
    %s9 = sphi 0, %s13
    %p10 = scmp.ge.s32.totalorder %s9, 4
    %s19 = sphi 0, %s21
    %s22 = sphi 0, %s19
    %s23 = sphi 0, %s22
    %s39 = sphi 0, %s23
    %s43 = sphi 0, %s43
    %s45 = sphi 0, %s43
    %s46 = sphi 0, %s45
    %s60 = sphi 0, %s46
    %s64 = sphi 0, %s64
    %s66 = sphi 0, %s64
    %s67 = sphi 0, %s66
    %s81 = sphi 0, %s67
    %s87 = sphi 0, %s89
    %s90 = sphi 0, %s87
    %s91 = sphi 0, %s90
    %s107 = sphi 0, %s91
  $region4: #{mixconv_forward.3} parent=0 // loop_header_branch
    %12 = sbr.rel (%p10) target = $region8
  $region5: #{mixconv_forward.3} parent=0 // loop_body
    %s14 = ssub.s32 %s9, 1
    %s15 = ssub.s32 %s9, 2
    %s16 = sadd.s32 %s9, 1
    %s17 = ssub.s32 %s9, %s16
    %p18 = scmp.eq.s32.totalorder %s17, 0
    %s20 = sadd.s32 %s19, 1
    %s21 = scalar_select %p18, %s19, %s20
    %p24 = pneg %p18
    %p25 = scmp.eq.s32.totalorder %s9, 1
    %p26 = por %p24, %p25
    %p27 = scmp.ne.s32.totalorder %s19, %s22
    %p28 = scmp.eq.s32.totalorder %s9, 0
    %p29 = por %p27, %p28
    %p30 = scmp.ne.s32.totalorder %s19, %s22
    %p31 = scmp.eq.s32.totalorder %s14, 1
    %p32 = por %p30, %p31
    %p33 = scmp.ne.s32.totalorder %s22, %s23
    %p34 = scmp.eq.s32.totalorder %s14, 0
    %p35 = por %p33, %p34
    %p36 = scmp.ne.s32.totalorder %s22, %s23
    %p37 = scmp.eq.s32.totalorder %s15, 1
    %p38 = por %p36, %p37
    %p40 = scmp.ne.s32.totalorder %s23, %s39
    %p41 = scmp.eq.s32.totalorder %s15, 0
    %p42 = por %p40, %p41
    %s44 = sadd.s32 %s43, 1
    %p47 = scmp.eq.s32.totalorder %s9, 1
    %p48 = scmp.ne.s32.totalorder %s43, %s45
    %p49 = scmp.eq.s32.totalorder %s9, 0
    %p50 = por %p48, %p49
    %p51 = scmp.ne.s32.totalorder %s43, %s45
    %p52 = scmp.eq.s32.totalorder %s14, 1
    %p53 = por %p51, %p52
    %p54 = scmp.ne.s32.totalorder %s45, %s46
    %p55 = scmp.eq.s32.totalorder %s14, 0
    %p56 = por %p54, %p55
    %p57 = scmp.ne.s32.totalorder %s45, %s46
    %p58 = scmp.eq.s32.totalorder %s15, 1
    %p59 = por %p57, %p58
    %p61 = scmp.ne.s32.totalorder %s46, %s60
    %p62 = scmp.eq.s32.totalorder %s15, 0
    %p63 = por %p61, %p62
    %s65 = sadd.s32 %s64, 1
    %p68 = scmp.eq.s32.totalorder %s9, 1
    %p69 = scmp.ne.s32.totalorder %s64, %s66
    %p70 = scmp.eq.s32.totalorder %s9, 0
    %p71 = por %p69, %p70
    %p72 = scmp.ne.s32.totalorder %s64, %s66
    %p73 = scmp.eq.s32.totalorder %s14, 1
    %p74 = por %p72, %p73
    %p75 = scmp.ne.s32.totalorder %s66, %s67
    %p76 = scmp.eq.s32.totalorder %s14, 0
    %p77 = por %p75, %p76
    %p78 = scmp.ne.s32.totalorder %s66, %s67
    %p79 = scmp.eq.s32.totalorder %s15, 1
    %p80 = por %p78, %p79
    %p82 = scmp.ne.s32.totalorder %s67, %s81
    %p83 = scmp.eq.s32.totalorder %s15, 0
    %p84 = por %p82, %p83
    %s85 = ssub.s32 %s9, %s16
    %p86 = scmp.eq.s32.totalorder %s85, 0
    %s88 = sadd.s32 %s87, 1
    %s89 = scalar_select %p86, %s87, %s88
    %p92 = pneg %p86
    %p93 = scmp.eq.s32.totalorder %s9, 1
    %p94 = por %p92, %p93
    %p95 = scmp.ne.s32.totalorder %s87, %s90
    %p96 = scmp.eq.s32.totalorder %s9, 0
    %p97 = por %p95, %p96
    %p98 = scmp.ne.s32.totalorder %s87, %s90
    %p99 = scmp.eq.s32.totalorder %s14, 1
    %p100 = por %p98, %p99
    %p101 = scmp.ne.s32.totalorder %s90, %s91
    %p102 = scmp.eq.s32.totalorder %s14, 0
    %p103 = por %p101, %p102
    %p104 = scmp.ne.s32.totalorder %s90, %s91
    %p105 = scmp.eq.s32.totalorder %s15, 1
    %p106 = por %p104, %p105
    %p108 = scmp.ne.s32.totalorder %s91, %s107
    %p109 = scmp.eq.s32.totalorder %s15, 0
    %p110 = por %p108, %p109
    %p111 = scmp.le.s32.totalorder 1, %s9
    %p112 = scmp.lt.s32.totalorder %s9, 3
    %p113 = pnand %p111, %p112
    %p114 = pneg %p113
    // Predicated region
    $region9: #{mixconv_forward.3} parent=5 // pred_check
      _
    $region10: #{mixconv_forward.3} parent=5 // pred_check_branch
      %116 = sbr.rel (%p113) target = $region12
    $region11: #{mixconv_forward.3} parent=5 // pred_region
      %s117 = ssub.s32 %s9, 1
      // Predicated region
      $region13: #{mixconv_forward.3} parent=11 // pred_check
        %p118 = pneg %p56
      $region14: #{mixconv_forward.3} parent=11 // pred_check_branch
        %120 = sbr.rel (%p118) target = $region16
      $region15: #{mixconv_forward.3} parent=11 // pred_region
        _
      $region16: #{mixconv_forward.3} parent=11 // pred_fallthru
        _
      // Predicated region
      $region17: #{mixconv_forward.3} parent=11 // pred_check
        %p121 = pneg %p77
      $region18: #{mixconv_forward.3} parent=11 // pred_check_branch
        %123 = sbr.rel (%p121) target = $region20
      $region19: #{mixconv_forward.3} parent=11 // pred_region
        _
      $region20: #{mixconv_forward.3} parent=11 // pred_fallthru
        _
    $region12: #{mixconv_forward.3} parent=5 // pred_fallthru
      _
    %p124 = scmp.lt.s32.totalorder %s9, 2
    // Predicated region
    $region21: #{mixconv_forward.3} parent=5 // pred_check
      %p125 = pneg %p124
    $region22: #{mixconv_forward.3} parent=5 // pred_check_branch
      %127 = sbr.rel (%p125) target = $region24
    $region23: #{mixconv_forward.3} parent=5 // pred_region
      // Predicated region
      $region25: #{mixconv_forward.3} parent=23 // pred_check
        %p128 = pneg %p29
      $region26: #{mixconv_forward.3} parent=23 // pred_check_branch
        %130 = sbr.rel (%p128) target = $region28
      $region27: #{mixconv_forward.3} parent=23 // pred_region
        %p131 = scmp.lt.s32.totalorder %s9, 1
        %s132 = scalar_select %p131, %s9, 1
        %s133 = smul.addr %s132, 4
        %s134 = smul.addr %s133, 4
        %s135 = scalar_lea.vmem %s0, %s134
      $region28: #{mixconv_forward.3} parent=23 // pred_fallthru
        _
    $region24: #{mixconv_forward.3} parent=5 // pred_fallthru
      _
    %p136 = scmp.le.s32.totalorder 1, %s9
    %p137 = scmp.lt.s32.totalorder %s9, 3
    %p138 = pnand %p136, %p137
    %p139 = pneg %p138
    // Predicated region
    $region29: #{mixconv_forward.3} parent=5 // pred_check
      _
    $region30: #{mixconv_forward.3} parent=5 // pred_check_branch
      %141 = sbr.rel (%p138) target = $region32
    $region31: #{mixconv_forward.3} parent=5 // pred_region
      %s142 = ssub.s32 %s9, 1
      %p143 = scmp.lt.s32.totalorder %s14, 1
      %s144 = scalar_select %p143, %s14, 1
      %s145 = smul.addr %s144, 4
      %s146 = smul.addr %s145, 4
      %s147 = scalar_lea.vmem %s0, %s146
      %p148 = pneg %p35
      %p149 = pneg %p32
      %p150 = pneg %p56
      %p151 = pneg %p53
      %p152 = pneg %p77
      %p153 = pneg %p74
      %p154 = pneg %p103
      %p155 = pneg %p100
      %p156 = scmp.lt.s32.totalorder %s14, 1
      %s157 = scalar_select %p156, %s14, 1
      %s158 = smul.addr %s157, 4
      %s159 = smul.addr %s158, 8
      %s160 = scalar_lea.vmem %s3, %s159
      %p161 = scmp.lt.s32.totalorder %s14, 1
      %s162 = scalar_select %p161, %s14, 1
      %s163 = smul.addr %s162, 4
      %s164 = smul.addr %s163, 4
      %s165 = scalar_lea.vmem %s0, %s164
      %p166 = scmp.lt.s32.totalorder %s14, 1
      %s167 = scalar_select %p166, %s14, 1
      %s168 = smul.addr %s167, 4
      %s169 = smul.addr %s168, 8
      %s170 = scalar_lea.vmem %s3, %s169
      %v171 = vld [vmem:[%s165] sm:$0xff]
      %v172 = vld [vmem:[%s165 + $0x8] sm:$0xff]
      %v173 = vunpack.c.l.bf16 %v171
      %v174 = vunpack.c.h.bf16 %v171
      %v175 = vunpack.c.l.bf16 %v172
      %v176 = vunpack.c.h.bf16 %v172
      %v177 = vld [vmem:[%s1] sm:$0xff]
      %v178 = vld [vmem:[%s1 + $0x8] sm:$0xff]
      %180 = vset.pattern.permute.xlu0 0
      %181 = vperm.xlu0 %180, %v177
      %v182 = vpop.permute.xlu0 %181
      %185 = vset.pattern.permute.xlu0 0
      %186 = vperm.xlu0 %185, %v178
      %v187 = vpop.permute.xlu0 %186
      %v189 = vmul.f32 %v173, %v182
      %v190 = vmul.f32 %v174, %v182
      %v191 = vmul.f32 %v175, %v187
      %v192 = vmul.f32 %v176, %v187
      %v193 = vld [vmem:[%s2] sm:$0xff]
      %v194 = vld [vmem:[%s2 + $0x8] sm:$0xff]
      %196 = vset.pattern.permute.xlu0 0
      %197 = vperm.xlu0 %196, %v193
      %v198 = vpop.permute.xlu0 %197
      %201 = vset.pattern.permute.xlu0 0
      %202 = vperm.xlu0 %201, %v194
      %v203 = vpop.permute.xlu0 %202
      %v205 = vadd.f32 %v189, %v198
      %v206 = vadd.f32 %v190, %v198
      %v207 = vadd.f32 %v191, %v203
      %v208 = vadd.f32 %v192, %v203
      %v209 = vxor.u32 %v205, 2147483648
      %v210 = vxor.u32 %v206, 2147483648
      %v211 = vxor.u32 %v207, 2147483648
      %v212 = vxor.u32 %v208, 2147483648
      %v213 = vmul.f32 %v209, 1.442695
      %v214 = vpow.pop %v213
      %v215 = vmul.f32 %v210, 1.442695
      %v216 = vpow.pop %v215
      %v217 = vmul.f32 %v211, 1.442695
      %v218 = vpow.pop %v217
      %v219 = vmul.f32 %v212, 1.442695
      %v220 = vpow.pop %v219
      %v221 = vadd.f32 %v214, 1.0
      %v222 = vadd.f32 %v216, 1.0
      %v223 = vadd.f32 %v218, 1.0
      %v224 = vadd.f32 %v220, 1.0
      %v225 = vrcp.pop %v221
      %v226 = vmul.f32 %v221, %v225
      %v227 = vsub.f32 1.0, %v226
      %v228 = vmul.f32 %v225, %v227
      %v229 = vadd.f32 %v225, %v228
      %vm230 = vweird.f32 %v221
      %vm231 = vweird.f32 %v225
      %vm232 = vmor %vm230, %vm231
      %v233 = vsel %vm232, %v225, %v229
      %v234 = vand.u32 2147483647, %v221
      %vm235 = vcmp.eq.f32.partialorder %v234, 8.507059e+37
      %v236 = vand.u32 %v221, 2147483648
      %v237 = vor.u32 1.1754944e-38, %v236
      %v238 = vsel %vm235, %v237, %v233
      %v239 = vmul.f32 1.0, %v238
      %v240 = vrcp.pop %v222
      %v241 = vmul.f32 %v222, %v240
      %v242 = vsub.f32 1.0, %v241
      %v243 = vmul.f32 %v240, %v242
      %v244 = vadd.f32 %v240, %v243
      %vm245 = vweird.f32 %v222
      %vm246 = vweird.f32 %v240
      %vm247 = vmor %vm245, %vm246
      %v248 = vsel %vm247, %v240, %v244
      %v249 = vand.u32 2147483647, %v222
      %vm250 = vcmp.eq.f32.partialorder %v249, 8.507059e+37
      %v251 = vand.u32 %v222, 2147483648
      %v252 = vor.u32 1.1754944e-38, %v251
      %v253 = vsel %vm250, %v252, %v248
      %v254 = vmul.f32 1.0, %v253
      %v255 = vrcp.pop %v223
      %v256 = vmul.f32 %v223, %v255
      %v257 = vsub.f32 1.0, %v256
      %v258 = vmul.f32 %v255, %v257
      %v259 = vadd.f32 %v255, %v258
      %vm260 = vweird.f32 %v223
      %vm261 = vweird.f32 %v255
      %vm262 = vmor %vm260, %vm261
      %v263 = vsel %vm262, %v255, %v259
      %v264 = vand.u32 2147483647, %v223
      %vm265 = vcmp.eq.f32.partialorder %v264, 8.507059e+37
      %v266 = vand.u32 %v223, 2147483648
      %v267 = vor.u32 1.1754944e-38, %v266
      %v268 = vsel %vm265, %v267, %v263
      %v269 = vmul.f32 1.0, %v268
      %v270 = vrcp.pop %v224
      %v271 = vmul.f32 %v224, %v270
      %v272 = vsub.f32 1.0, %v271
      %v273 = vmul.f32 %v270, %v272
      %v274 = vadd.f32 %v270, %v273
      %vm275 = vweird.f32 %v224
      %vm276 = vweird.f32 %v270
      %vm277 = vmor %vm275, %vm276
      %v278 = vsel %vm277, %v270, %v274
      %v279 = vand.u32 2147483647, %v224
      %vm280 = vcmp.eq.f32.partialorder %v279, 8.507059e+37
      %v281 = vand.u32 %v224, 2147483648
      %v282 = vor.u32 1.1754944e-38, %v281
      %v283 = vsel %vm280, %v282, %v278
      %v284 = vmul.f32 1.0, %v283
      %v285 = vmul.f32 %v205, %v239
      %v286 = vmul.f32 %v206, %v254
      %v287 = vmul.f32 %v207, %v269
      %v288 = vmul.f32 %v208, %v284
      %289 = vst [vmem:[%s170] sm:$0xff] %v285
      %290 = vst [vmem:[%s170 + $0x8] sm:$0xff] %v286
      %291 = vst [vmem:[%s170 + $0x10] sm:$0xff] %v287
      %292 = vst [vmem:[%s170 + $0x18] sm:$0xff] %v288
      %p293 = scmp.lt.s32.totalorder %s14, 1
      %s294 = scalar_select %p293, %s14, 1
      %s295 = smul.addr %s294, 4
      %s296 = smul.addr %s295, 8
      %s297 = scalar_lea.vmem %s3, %s296
      // Predicated region
      $region33: #{mixconv_forward.3} parent=31 // pred_check
        %p298 = pneg %p100
      $region34: #{mixconv_forward.3} parent=31 // pred_check_branch
        %300 = sbr.rel (%p298) target = $region36
      $region35: #{mixconv_forward.3} parent=31 // pred_region
        _
      $region36: #{mixconv_forward.3} parent=31 // pred_fallthru
        _
    $region32: #{mixconv_forward.3} parent=5 // pred_fallthru
      _
    %p301 = scmp.le.s32.totalorder 2, %s9
    // Predicated region
    $region37: #{mixconv_forward.3} parent=5 // pred_check
      %p302 = pneg %p301
    $region38: #{mixconv_forward.3} parent=5 // pred_check_branch
      %304 = sbr.rel (%p302) target = $region40
    $region39: #{mixconv_forward.3} parent=5 // pred_region
      %s305 = ssub.s32 %s9, 2
      // Predicated region
      $region41: #{mixconv_forward.3} parent=39 // pred_check
        %p306 = pneg %p106
      $region42: #{mixconv_forward.3} parent=39 // pred_check_branch
        %308 = sbr.rel (%p306) target = $region44
      $region43: #{mixconv_forward.3} parent=39 // pred_region
        %p309 = scmp.lt.s32.totalorder %s15, 1
        %s310 = scalar_select %p309, %s15, 1
        %s311 = smul.addr %s310, 4
        %s312 = smul.addr %s311, 8
        %s313 = scalar_lea.vmem %s3, %s312
      $region44: #{mixconv_forward.3} parent=39 // pred_fallthru
        _
    $region40: #{mixconv_forward.3} parent=5 // pred_fallthru
      _
  $region6: #{mixconv_forward.3} parent=0 // loop_footer
    %s13 = sadd.s32 1, %s9
  $region7: #{mixconv_forward.3} parent=0 // loop_footer_branch
    %8 = sbr.rel target = $region3
  $region8: #{mixconv_forward.3} parent=0 // loop_exit
    _

// kernel: mixconv_forward.2
$region0: #{mixconv_forward.2}
  #allocation0 [shape = 'u32[]', space=smem, size = 0x4, offset = 0x4, fixed_abs, tag = 'smem constant byte address 0x4 - core index']
  #allocation1 [shape = 'u32[72,128]{1,0:T(1,128)}', space=vmem, size = 0x9000, scoped, tag = 'internal scratch']
  %s0 = inlined_call_operand.vmem [shape: bf16[2,16,290], index: 0, kind: input, shape index: {}]
  %s1 = inlined_call_operand.vmem [shape: bf16[1,8,16], index: 1, kind: input, shape index: {}]
  %s2 = inlined_call_operand.vmem [shape: bf16[9,8,16], index: 2, kind: input, shape index: {}]
  %s3 = inlined_call_operand.vmem [shape: bf16[2,16,256], index: 3, kind: output, shape index: {0}]
  %s4 = inlined_call_operand.vmem [shape: f32[2,16,2], index: 4, kind: output, shape index: {1}]
  %5 = xla_tuple %s3, %s4
  %s6 = sld [smem:[#allocation0]]
  $region53: #{mixconv_forward.2} parent=0
    _
  %s8 = ssub.s32 1, %s6
  %s9 = scalar_select 0, %s8, %s6
  loop: start=0, step=1, limit=4
  $region2: #{mixconv_forward.2} parent=0 // loop_pre_header
    _
  $region3: #{mixconv_forward.2} parent=0 // loop_header
    %s11 = sphi 0, %s15
    %p12 = scmp.ge.s32.totalorder %s11, 4
    %s21 = sphi 0, %s23
    %s24 = sphi 0, %s21
    %s25 = sphi 0, %s24
    %s41 = sphi 0, %s25
    %s45 = sphi 0, %s45
    %s47 = sphi 0, %s45
    %s48 = sphi 0, %s47
    %s62 = sphi 0, %s48
    %s66 = sphi 0, %s66
    %s68 = sphi 0, %s66
    %s69 = sphi 0, %s68
    %s83 = sphi 0, %s69
    %s89 = sphi 0, %s91
    %s92 = sphi 0, %s89
    %s93 = sphi 0, %s92
    %s109 = sphi 0, %s93
    %s115 = sphi 0, %s117
    %s118 = sphi 0, %s115
    %s119 = sphi 0, %s118
    %s135 = sphi 0, %s119
  $region4: #{mixconv_forward.2} parent=0 // loop_header_branch
    %14 = sbr.rel (%p12) target = $region8
  $region5: #{mixconv_forward.2} parent=0 // loop_body
    %s16 = ssub.s32 %s11, 1
    %s17 = ssub.s32 %s11, 2
    %s18 = sadd.s32 %s11, 1
    %s19 = ssub.s32 %s11, %s18
    %p20 = scmp.eq.s32.totalorder %s19, 0
    %s22 = sadd.s32 %s21, 1
    %s23 = scalar_select %p20, %s21, %s22
    %p26 = pneg %p20
    %p27 = scmp.eq.s32.totalorder %s11, 1
    %p28 = por %p26, %p27
    %p29 = scmp.ne.s32.totalorder %s21, %s24
    %p30 = scmp.eq.s32.totalorder %s11, 0
    %p31 = por %p29, %p30
    %p32 = scmp.ne.s32.totalorder %s21, %s24
    %p33 = scmp.eq.s32.totalorder %s16, 1
    %p34 = por %p32, %p33
    %p35 = scmp.ne.s32.totalorder %s24, %s25
    %p36 = scmp.eq.s32.totalorder %s16, 0
    %p37 = por %p35, %p36
    %p38 = scmp.ne.s32.totalorder %s24, %s25
    %p39 = scmp.eq.s32.totalorder %s17, 1
    %p40 = por %p38, %p39
    %p42 = scmp.ne.s32.totalorder %s25, %s41
    %p43 = scmp.eq.s32.totalorder %s17, 0
    %p44 = por %p42, %p43
    %s46 = sadd.s32 %s45, 1
    %p49 = scmp.eq.s32.totalorder %s11, 1
    %p50 = scmp.ne.s32.totalorder %s45, %s47
    %p51 = scmp.eq.s32.totalorder %s11, 0
    %p52 = por %p50, %p51
    %p53 = scmp.ne.s32.totalorder %s45, %s47
    %p54 = scmp.eq.s32.totalorder %s16, 1
    %p55 = por %p53, %p54
    %p56 = scmp.ne.s32.totalorder %s47, %s48
    %p57 = scmp.eq.s32.totalorder %s16, 0
    %p58 = por %p56, %p57
    %p59 = scmp.ne.s32.totalorder %s47, %s48
    %p60 = scmp.eq.s32.totalorder %s17, 1
    %p61 = por %p59, %p60
    %p63 = scmp.ne.s32.totalorder %s48, %s62
    %p64 = scmp.eq.s32.totalorder %s17, 0
    %p65 = por %p63, %p64
    %s67 = sadd.s32 %s66, 1
    %p70 = scmp.eq.s32.totalorder %s11, 1
    %p71 = scmp.ne.s32.totalorder %s66, %s68
    %p72 = scmp.eq.s32.totalorder %s11, 0
    %p73 = por %p71, %p72
    %p74 = scmp.ne.s32.totalorder %s66, %s68
    %p75 = scmp.eq.s32.totalorder %s16, 1
    %p76 = por %p74, %p75
    %p77 = scmp.ne.s32.totalorder %s68, %s69
    %p78 = scmp.eq.s32.totalorder %s16, 0
    %p79 = por %p77, %p78
    %p80 = scmp.ne.s32.totalorder %s68, %s69
    %p81 = scmp.eq.s32.totalorder %s17, 1
    %p82 = por %p80, %p81
    %p84 = scmp.ne.s32.totalorder %s69, %s83
    %p85 = scmp.eq.s32.totalorder %s17, 0
    %p86 = por %p84, %p85
    %s87 = ssub.s32 %s11, %s18
    %p88 = scmp.eq.s32.totalorder %s87, 0
    %s90 = sadd.s32 %s89, 1
    %s91 = scalar_select %p88, %s89, %s90
    %p94 = pneg %p88
    %p95 = scmp.eq.s32.totalorder %s11, 1
    %p96 = por %p94, %p95
    %p97 = scmp.ne.s32.totalorder %s89, %s92
    %p98 = scmp.eq.s32.totalorder %s11, 0
    %p99 = por %p97, %p98
    %p100 = scmp.ne.s32.totalorder %s89, %s92
    %p101 = scmp.eq.s32.totalorder %s16, 1
    %p102 = por %p100, %p101
    %p103 = scmp.ne.s32.totalorder %s92, %s93
    %p104 = scmp.eq.s32.totalorder %s16, 0
    %p105 = por %p103, %p104
    %p106 = scmp.ne.s32.totalorder %s92, %s93
    %p107 = scmp.eq.s32.totalorder %s17, 1
    %p108 = por %p106, %p107
    %p110 = scmp.ne.s32.totalorder %s93, %s109
    %p111 = scmp.eq.s32.totalorder %s17, 0
    %p112 = por %p110, %p111
    %s113 = ssub.s32 %s11, %s18
    %p114 = scmp.eq.s32.totalorder %s113, 0
    %s116 = sadd.s32 %s115, 1
    %s117 = scalar_select %p114, %s115, %s116
    %p120 = pneg %p114
    %p121 = scmp.eq.s32.totalorder %s11, 1
    %p122 = por %p120, %p121
    %p123 = scmp.ne.s32.totalorder %s115, %s118
    %p124 = scmp.eq.s32.totalorder %s11, 0
    %p125 = por %p123, %p124
    %p126 = scmp.ne.s32.totalorder %s115, %s118
    %p127 = scmp.eq.s32.totalorder %s16, 1
    %p128 = por %p126, %p127
    %p129 = scmp.ne.s32.totalorder %s118, %s119
    %p130 = scmp.eq.s32.totalorder %s16, 0
    %p131 = por %p129, %p130
    %p132 = scmp.ne.s32.totalorder %s118, %s119
    %p133 = scmp.eq.s32.totalorder %s17, 1
    %p134 = por %p132, %p133
    %p136 = scmp.ne.s32.totalorder %s119, %s135
    %p137 = scmp.eq.s32.totalorder %s17, 0
    %p138 = por %p136, %p137
    %p139 = scmp.le.s32.totalorder 1, %s11
    %p140 = scmp.lt.s32.totalorder %s11, 3
    %p141 = pnand %p139, %p140
    %p142 = pneg %p141
    // Predicated region
    $region9: #{mixconv_forward.2} parent=5 // pred_check
      _
    $region10: #{mixconv_forward.2} parent=5 // pred_check_branch
      %144 = sbr.rel (%p141) target = $region12
    $region11: #{mixconv_forward.2} parent=5 // pred_region
      %s145 = ssub.s32 %s11, 1
      // Predicated region
      $region13: #{mixconv_forward.2} parent=11 // pred_check
        %p146 = pneg %p58
      $region14: #{mixconv_forward.2} parent=11 // pred_check_branch
        %148 = sbr.rel (%p146) target = $region16
      $region15: #{mixconv_forward.2} parent=11 // pred_region
        _
      $region16: #{mixconv_forward.2} parent=11 // pred_fallthru
        _
      // Predicated region
      $region17: #{mixconv_forward.2} parent=11 // pred_check
        %p149 = pneg %p79
      $region18: #{mixconv_forward.2} parent=11 // pred_check_branch
        %151 = sbr.rel (%p149) target = $region20
      $region19: #{mixconv_forward.2} parent=11 // pred_region
        _
      $region20: #{mixconv_forward.2} parent=11 // pred_fallthru
        _
    $region12: #{mixconv_forward.2} parent=5 // pred_fallthru
      _
    %p152 = scmp.lt.s32.totalorder %s11, 2
    // Predicated region
    $region21: #{mixconv_forward.2} parent=5 // pred_check
      %p153 = pneg %p152
    $region22: #{mixconv_forward.2} parent=5 // pred_check_branch
      %155 = sbr.rel (%p153) target = $region24
    $region23: #{mixconv_forward.2} parent=5 // pred_region
      // Predicated region
      $region25: #{mixconv_forward.2} parent=23 // pred_check
        %p156 = pneg %p31
      $region26: #{mixconv_forward.2} parent=23 // pred_check_branch
        %158 = sbr.rel (%p156) target = $region28
      $region27: #{mixconv_forward.2} parent=23 // pred_region
        %p159 = scmp.lt.s32.totalorder %s11, 1
        %s160 = scalar_select %p159, %s11, 1
        %s161 = smul.addr %s160, 6
        %s162 = smul.addr %s161, 4
        %s163 = scalar_lea.vmem %s0, %s162
      $region28: #{mixconv_forward.2} parent=23 // pred_fallthru
        _
    $region24: #{mixconv_forward.2} parent=5 // pred_fallthru
      _
    %p164 = scmp.le.s32.totalorder 1, %s11
    %p165 = scmp.lt.s32.totalorder %s11, 3
    %p166 = pnand %p164, %p165
    %p167 = pneg %p166
    // Predicated region
    $region29: #{mixconv_forward.2} parent=5 // pred_check
      _
    $region30: #{mixconv_forward.2} parent=5 // pred_check_branch
      %169 = sbr.rel (%p166) target = $region32
    $region31: #{mixconv_forward.2} parent=5 // pred_region
      %s170 = ssub.s32 %s11, 1
      %p171 = scmp.lt.s32.totalorder %s16, 1
      %s172 = scalar_select %p171, %s16, 1
      %s173 = smul.addr %s172, 6
      %s174 = smul.addr %s173, 4
      %s175 = scalar_lea.vmem %s0, %s174
      %p176 = pneg %p37
      %p177 = pneg %p34
      %p178 = pneg %p58
      %p179 = pneg %p55
      %p180 = pneg %p79
      %p181 = pneg %p76
      %p182 = pneg %p105
      %p183 = pneg %p102
      %p184 = scmp.lt.s32.totalorder %s16, 1
      %s185 = scalar_select %p184, %s16, 1
      %s186 = smul.addr %s185, 4
      %s187 = smul.addr %s186, 4
      %s188 = scalar_lea.vmem %s3, %s187
      %p189 = pneg %p131
      %p190 = pneg %p128
      %p191 = scmp.lt.s32.totalorder %s16, 1
      %s192 = scalar_select %p191, %s16, 1
      %s193 = smul.addr %s192, 2
      %s194 = smul.addr %s193, 8
      %s195 = scalar_lea.vmem %s4, %s194
      %p196 = scmp.lt.s32.totalorder %s16, 1
      %s197 = scalar_select %p196, %s16, 1
      %s198 = smul.addr %s197, 6
      %s199 = smul.addr %s198, 4
      %s200 = scalar_lea.vmem %s0, %s199
      %p201 = scmp.lt.s32.totalorder %s16, 1
      %s202 = scalar_select %p201, %s16, 1
      %s203 = smul.addr %s202, 4
      %s204 = smul.addr %s203, 4
      %s205 = scalar_lea.vmem %s3, %s204
      %p206 = scmp.lt.s32.totalorder %s16, 1
      %s207 = scalar_select %p206, %s16, 1
      %s208 = smul.addr %s207, 2
      %s209 = smul.addr %s208, 8
      %s210 = scalar_lea.vmem %s4, %s209
      %v214 = vlaneseq
      %v215 = vand.u32 %v214, 127
      %v216 = vadd.s32 %v215, 128
      %vm217 = vcmp.lt.s32.totalorder %v215, 0
      %v218 = vsub.s32 0, %v215
      %v219 = vsel %vm217, %v218, %v215
      %v220 = vshrl.u32 %v219, 4
      %v221 = vand.u32 %v219, 15
      %v222 = vsub.s32 0, %v221
      %v223 = vsel %vm217, %v222, %v221
      %vm224 = vcmp.lt.s32.totalorder %v216, 0
      %v225 = vsub.s32 0, %v216
      %v226 = vsel %vm224, %v225, %v216
      %v227 = vshrl.u32 %v226, 4
      %v228 = vand.u32 %v226, 15
      %v229 = vsub.s32 0, %v228
      %v230 = vsel %vm224, %v229, %v228
      %vm231 = vcmp.ne.s32.totalorder %v223, 0
      %vm232 = vcmp.ne.s32.totalorder %v230, 0
      %vm233 = vcmp.lt.s32.totalorder %v223, 0
      %vm234 = vcmp.lt.s32.totalorder %v230, 0
      %vm235 = vmand %vm233, %vm231
      %vm236 = vmand %vm234, %vm232
      %v237 = vadd.s32 %v223, 16
      %v238 = vadd.s32 %v230, 16
      %v239 = vsel %vm235, %v237, %v223
      %v240 = vsel %vm236, %v238, %v230
      %v241 = vadd.s32 %v239, 4294967295
      %v242 = vadd.s32 %v240, 4294967295
      %vm243 = vcmp.ge.s32.totalorder %v241, 0
      %vm244 = vcmp.ge.s32.totalorder %v242, 0
      %vm245 = vcmp.lt.s32.totalorder %v241, 16
      %vm246 = vcmp.lt.s32.totalorder %v242, 16
      %vm247 = vmand %vm243, %vm245
      %vm248 = vmand %vm244, %vm246
      %v249 = vadd.s32 %v239, 1
      %v250 = vadd.s32 %v240, 1
      %vm251 = vcmp.ge.s32.totalorder %v249, 0
      %vm252 = vcmp.ge.s32.totalorder %v250, 0
      %vm253 = vcmp.lt.s32.totalorder %v249, 16
      %vm254 = vcmp.lt.s32.totalorder %v250, 16
      %vm255 = vmand %vm251, %vm253
      %vm256 = vmand %vm252, %vm254
      %v257 = vld [vmem:[%s200] sm:$0xff]
      %v258 = vld [vmem:[%s200 + $0x8] sm:$0xf]
      %v259 = vld [vmem:[%s200 + $0xc] sm:$0xff]
      %v260 = vld [vmem:[%s200 + $0x14] sm:$0xf]
      %v261 = vld [vmem:[%s1] sm:$0xf]
      %v266 = vunpack.c.l.b16 %v257
      %v267 = vunpack.c.h.b16 %v257
      %v268 = vunpack.c.l.b16 %v258
      %v269 = vunpack.c.l.b16 %v259
      %v270 = vunpack.c.h.b16 %v259
      %v271 = vunpack.c.l.b16 %v260
      %v272 = vpack.c.b16 %v269, %v266
      %v273 = vpack.c.b16 %v270, %v267
      %v274 = vpack.c.b16 %v271, %v268
      %275 = vrot.lane.b32.xlu0 %v272, 111
      %v276 = vpop.permute.xlu0 %275
      %277 = vrot.lane.b32.xlu0 %v273, 111
      %v278 = vpop.permute.xlu0 %277
      %279 = vrot.lane.b32.xlu0 %v274, 111
      %v280 = vpop.permute.xlu0 %279
      %vm281 = vcmask 908288
      %v282 = vsel %vm281, %v276, %v278
      %v283 = vsel %vm281, %v278, %v280
      %vm286 = vcmask 130048
      %v288 = vsel %vm286, %v261, 0
      %290 = vmatpush.bf16.msra.mxu0 0
      %291 = vmatpush.bf16.msra.mxu0 0
      %292 = vmatpush.bf16.msra.mxu0 0
      %293 = vmatpush.bf16.msra.mxu0 0
      %294 = vmatpush.bf16.msra.mxu0 0
      %295 = vmatpush.bf16.msra.mxu0 0
      %296 = vmatpush.bf16.msra.mxu0 0
      %297 = vmatpush.bf16.msra.mxu0 %v282
      %298 = vmatmul.bf16.gmra.mxu0 %v288
      %v299 = vpop.f32.mrf.mxu0
      %v300 = vadd.f32 0.0, %v299
      %v301 = vpop.f32.mrf.mxu0
      %302 = vdwg.mxu0
      %303 = vmatpush.bf16.msra.mxu0 0
      %304 = vmatpush.bf16.msra.mxu0 0
      %305 = vmatpush.bf16.msra.mxu0 0
      %306 = vmatpush.bf16.msra.mxu0 0
      %307 = vmatpush.bf16.msra.mxu0 0
      %308 = vmatpush.bf16.msra.mxu0 0
      %309 = vmatpush.bf16.msra.mxu0 0
      %310 = vmatpush.bf16.msra.mxu0 %v283
      %311 = vmatmul.bf16.gmra.mxu0 %v288
      %v312 = vpop.f32.mrf.mxu0
      %v313 = vadd.f32 0.0, %v312
      %v314 = vpop.f32.mrf.mxu0
      %315 = vdwg.mxu0
      %v316 = vld [vmem:[%s200] sm:$0xff]
      %v317 = vld [vmem:[%s200 + $0xc] sm:$0xff]
      %v318 = vsel %vm247, 1, 0
      %v319 = vsel %vm248, 1, 0
      %vm320 = vcmp.eq.s32.totalorder %v318, 1
      %vm321 = vcmp.eq.s32.totalorder %v319, 1
      %vm322 = vmpackc.low %vm321, %vm320
      %v323 = vsel %vm322, %v316, 0
      %v324 = vsel %vm322, %v317, 0
      %v325 = vld [vmem:[%s2] sm:$0xf]
      %s326 = scalar_lea.vmem %s2, 4
      %v327 = vld [vmem:[%s326] sm:$0xf]
      %328 = vrot.lane.b32.xlu0 %v272, 127
      %v329 = vpop.permute.xlu0 %328
      %330 = vrot.lane.b32.xlu0 %v273, 127
      %v331 = vpop.permute.xlu0 %330
      %332 = vrot.lane.b32.xlu0 %v274, 127
      %v333 = vpop.permute.xlu0 %332
      %vm334 = vcmask 1039360
      %v335 = vsel %vm334, %v329, %v331
      %v336 = vsel %vm334, %v331, %v333
      %v340 = vsel %vm286, %v327, 0
      %342 = vmatpush.bf16.msra.mxu0 0
      %343 = vmatpush.bf16.msra.mxu0 0
      %344 = vmatpush.bf16.msra.mxu0 0
      %345 = vmatpush.bf16.msra.mxu0 0
      %346 = vmatpush.bf16.msra.mxu0 0
      %347 = vmatpush.bf16.msra.mxu0 0
      %348 = vmatpush.bf16.msra.mxu0 0
      %349 = vmatpush.bf16.msra.mxu0 %v335
      %350 = vmatmul.bf16.gmra.mxu0 %v340
      %v351 = vpop.f32.mrf.mxu0
      %v352 = vadd.f32 0.0, %v351
      %v353 = vpop.f32.mrf.mxu0
      %354 = vdwg.mxu0
      %355 = vmatpush.bf16.msra.mxu0 0
      %356 = vmatpush.bf16.msra.mxu0 0
      %357 = vmatpush.bf16.msra.mxu0 0
      %358 = vmatpush.bf16.msra.mxu0 0
      %359 = vmatpush.bf16.msra.mxu0 0
      %360 = vmatpush.bf16.msra.mxu0 0
      %361 = vmatpush.bf16.msra.mxu0 0
      %362 = vmatpush.bf16.msra.mxu0 %v336
      %363 = vmatmul.bf16.gmra.mxu0 %v340
      %v364 = vpop.f32.mrf.mxu0
      %v365 = vadd.f32 0.0, %v364
      %v366 = vpop.f32.mrf.mxu0
      %367 = vdwg.mxu0
      %v370 = vunpack.c.l.b16 %v323
      %v371 = vunpack.c.h.b16 %v323
      %v372 = vunpack.c.l.b16 %v324
      %v373 = vunpack.c.h.b16 %v324
      %v374 = vpack.c.b16 %v372, %v370
      %v375 = vpack.c.b16 %v373, %v371
      %v379 = vsel %vm286, %v325, 0
      %381 = vmatpush.bf16.msra.mxu0 0
      %382 = vmatpush.bf16.msra.mxu0 0
      %383 = vmatpush.bf16.msra.mxu0 0
      %384 = vmatpush.bf16.msra.mxu0 0
      %385 = vmatpush.bf16.msra.mxu0 0
      %386 = vmatpush.bf16.msra.mxu0 0
      %387 = vmatpush.bf16.msra.mxu0 0
      %388 = vmatpush.bf16.msra.mxu0 %v374
      %389 = vmatmul.bf16.gmra.mxu0 %v379
      %v390 = vpop.f32.mrf.mxu0
      %v391 = vadd.f32 %v352, %v390
      %v392 = vpop.f32.mrf.mxu0
      %393 = vdwg.mxu0
      %394 = vmatpush.bf16.msra.mxu0 0
      %395 = vmatpush.bf16.msra.mxu0 0
      %396 = vmatpush.bf16.msra.mxu0 0
      %397 = vmatpush.bf16.msra.mxu0 0
      %398 = vmatpush.bf16.msra.mxu0 0
      %399 = vmatpush.bf16.msra.mxu0 0
      %400 = vmatpush.bf16.msra.mxu0 0
      %401 = vmatpush.bf16.msra.mxu0 %v375
      %402 = vmatmul.bf16.gmra.mxu0 %v379
      %v403 = vpop.f32.mrf.mxu0
      %v404 = vadd.f32 %v365, %v403
      %v405 = vpop.f32.mrf.mxu0
      %406 = vdwg.mxu0
      %v407 = vsel %vm255, 1, 0
      %v408 = vsel %vm256, 1, 0
      %vm409 = vcmp.eq.s32.totalorder %v407, 1
      %vm410 = vcmp.eq.s32.totalorder %v408, 1
      %vm411 = vmpackc.low %vm410, %vm409
      %v412 = vsel %vm411, 65537, 0
      %413 = vrot.lane.b32.xlu0 %v412, 2
      %v414 = vpop.permute.xlu0 %413
      %v415 = vrot.slane %v414, 4
      %vm416 = vcmask 15360
      %v417 = vsel %vm416, %v415, %v414
      %v418 = vunpack.c.l.b16 %v417
      %v419 = vunpack.c.h.b16 %v417
      %v420 = vunpack.c.l.b16 0
      %v421 = vunpack.c.h.b16 0
      %vm422 = vcmp.ne.s32.totalorder %v418, %v420
      %vm423 = vcmp.ne.s32.totalorder %v419, %v421
      %vm424 = vmpackc.low %vm423, %vm422
      %v425 = vunpack.c.l.b16 %v415
      %v426 = vunpack.c.h.b16 %v415
      %v427 = vunpack.c.l.b16 0
      %v428 = vunpack.c.h.b16 0
      %vm429 = vcmp.ne.s32.totalorder %v425, %v427
      %vm430 = vcmp.ne.s32.totalorder %v426, %v428
      %vm431 = vmpackc.low %vm430, %vm429
      %v432 = vsel %vm424, %v257, 0
      %v433 = vsel %vm431, %v258, 0
      %v434 = vsel %vm424, %v259, 0
      %v435 = vsel %vm431, %v260, 0
      %s436 = scalar_lea.vmem %s2, 8
      %v437 = vld [vmem:[%s436] sm:$0xf]
      %v442 = vunpack.c.l.b16 %v432
      %v443 = vunpack.c.h.b16 %v432
      %v444 = vunpack.c.l.b16 %v433
      %v445 = vunpack.c.l.b16 %v434
      %v446 = vunpack.c.h.b16 %v434
      %v447 = vunpack.c.l.b16 %v435
      %v448 = vpack.c.b16 %v445, %v442
      %v449 = vpack.c.b16 %v446, %v443
      %v450 = vpack.c.b16 %v447, %v444
      %451 = vrot.lane.b32.xlu0 %v448, 126
      %v452 = vpop.permute.xlu0 %451
      %453 = vrot.lane.b32.xlu0 %v449, 126
      %v454 = vpop.permute.xlu0 %453
      %455 = vrot.lane.b32.xlu0 %v450, 126
      %v456 = vpop.permute.xlu0 %455
      %vm457 = vcmask 1031168
      %v458 = vsel %vm457, %v452, %v454
      %v459 = vsel %vm457, %v454, %v456
      %v463 = vsel %vm286, %v437, 0
      %465 = vmatpush.bf16.msra.mxu0 0
      %466 = vmatpush.bf16.msra.mxu0 0
      %467 = vmatpush.bf16.msra.mxu0 0
      %468 = vmatpush.bf16.msra.mxu0 0
      %469 = vmatpush.bf16.msra.mxu0 0
      %470 = vmatpush.bf16.msra.mxu0 0
      %471 = vmatpush.bf16.msra.mxu0 0
      %472 = vmatpush.bf16.msra.mxu0 %v458
      %473 = vmatmul.bf16.gmra.mxu0 %v463
      %v474 = vpop.f32.mrf.mxu0
      %v475 = vadd.f32 0.0, %v474
      %v476 = vpop.f32.mrf.mxu0
      %477 = vdwg.mxu0
      %478 = vmatpush.bf16.msra.mxu0 0
      %479 = vmatpush.bf16.msra.mxu0 0
      %480 = vmatpush.bf16.msra.mxu0 0
      %481 = vmatpush.bf16.msra.mxu0 0
      %482 = vmatpush.bf16.msra.mxu0 0
      %483 = vmatpush.bf16.msra.mxu0 0
      %484 = vmatpush.bf16.msra.mxu0 0
      %485 = vmatpush.bf16.msra.mxu0 %v459
      %486 = vmatmul.bf16.gmra.mxu0 %v463
      %v487 = vpop.f32.mrf.mxu0
      %v488 = vadd.f32 0.0, %v487
      %v489 = vpop.f32.mrf.mxu0
      %490 = vdwg.mxu0
      %v491 = vadd.f32 %v391, %v475
      %v492 = vadd.f32 %v404, %v488
      %v493 = vsel %vm322, 65537, 0
      %494 = vrot.lane.b32.xlu0 %v493, 16
      %v495 = vpop.permute.xlu0 %494
      %v496 = vrot.slane %v495, 4
      %vm497 = vcmask 130048
      %v498 = vsel %vm497, %v496, %v495
      %v499 = vunpack.c.l.b16 %v498
      %v500 = vunpack.c.h.b16 %v498
      %v501 = vunpack.c.l.b16 0
      %v502 = vunpack.c.h.b16 0
      %vm503 = vcmp.ne.s32.totalorder %v499, %v501
      %vm504 = vcmp.ne.s32.totalorder %v500, %v502
      %vm505 = vmpackc.low %vm504, %vm503
      %v506 = vunpack.c.l.b16 %v496
      %v507 = vunpack.c.h.b16 %v496
      %v508 = vunpack.c.l.b16 0
      %v509 = vunpack.c.h.b16 0
      %vm510 = vcmp.ne.s32.totalorder %v506, %v508
      %vm511 = vcmp.ne.s32.totalorder %v507, %v509
      %vm512 = vmpackc.low %vm511, %vm510
      %v513 = vsel %vm505, %v257, 0
      %v514 = vsel %vm512, %v258, 0
      %v515 = vsel %vm505, %v259, 0
      %v516 = vsel %vm512, %v260, 0
      %s517 = scalar_lea.vmem %s2, 12
      %v518 = vld [vmem:[%s517] sm:$0xf]
      %v523 = vunpack.c.l.b16 %v513
      %v524 = vunpack.c.h.b16 %v513
      %v525 = vunpack.c.l.b16 %v514
      %v526 = vunpack.c.l.b16 %v515
      %v527 = vunpack.c.h.b16 %v515
      %v528 = vunpack.c.l.b16 %v516
      %v529 = vpack.c.b16 %v526, %v523
      %v530 = vpack.c.b16 %v527, %v524
      %v531 = vpack.c.b16 %v528, %v525
      %532 = vrot.lane.b32.xlu0 %v529, 112
      %v533 = vpop.permute.xlu0 %532
      %534 = vrot.lane.b32.xlu0 %v530, 112
      %v535 = vpop.permute.xlu0 %534
      %536 = vrot.lane.b32.xlu0 %v531, 112
      %v537 = vpop.permute.xlu0 %536
      %vm538 = vcmask 916480
      %v539 = vsel %vm538, %v533, %v535
      %v540 = vsel %vm538, %v535, %v537
      %v544 = vsel %vm286, %v518, 0
      %546 = vmatpush.bf16.msra.mxu0 0
      %547 = vmatpush.bf16.msra.mxu0 0
      %548 = vmatpush.bf16.msra.mxu0 0
      %549 = vmatpush.bf16.msra.mxu0 0
      %550 = vmatpush.bf16.msra.mxu0 0
      %551 = vmatpush.bf16.msra.mxu0 0
      %552 = vmatpush.bf16.msra.mxu0 0
      %553 = vmatpush.bf16.msra.mxu0 %v539
      %554 = vmatmul.bf16.gmra.mxu0 %v544
      %v555 = vpop.f32.mrf.mxu0
      %v556 = vadd.f32 0.0, %v555
      %v557 = vpop.f32.mrf.mxu0
      %558 = vdwg.mxu0
      %559 = vmatpush.bf16.msra.mxu0 0
      %560 = vmatpush.bf16.msra.mxu0 0
      %561 = vmatpush.bf16.msra.mxu0 0
      %562 = vmatpush.bf16.msra.mxu0 0
      %563 = vmatpush.bf16.msra.mxu0 0
      %564 = vmatpush.bf16.msra.mxu0 0
      %565 = vmatpush.bf16.msra.mxu0 0
      %566 = vmatpush.bf16.msra.mxu0 %v540
      %567 = vmatmul.bf16.gmra.mxu0 %v544
      %v568 = vpop.f32.mrf.mxu0
      %v569 = vadd.f32 0.0, %v568
      %v570 = vpop.f32.mrf.mxu0
      %571 = vdwg.mxu0
      %v572 = vadd.f32 %v491, %v556
      %v573 = vadd.f32 %v492, %v569
      %s574 = scalar_lea.vmem %s2, 16
      %v575 = vld [vmem:[%s574] sm:$0xf]
      %v577 = vsel %vm286, %v575, 0
      %579 = vmatpush.bf16.msra.mxu0 0
      %580 = vmatpush.bf16.msra.mxu0 0
      %581 = vmatpush.bf16.msra.mxu0 0
      %582 = vmatpush.bf16.msra.mxu0 0
      %583 = vmatpush.bf16.msra.mxu0 0
      %584 = vmatpush.bf16.msra.mxu0 0
      %585 = vmatpush.bf16.msra.mxu0 0
      %586 = vmatpush.bf16.msra.mxu0 %v282
      %587 = vmatmul.bf16.gmra.mxu0 %v577
      %v588 = vpop.f32.mrf.mxu0
      %v589 = vadd.f32 0.0, %v588
      %v590 = vpop.f32.mrf.mxu0
      %591 = vdwg.mxu0
      %592 = vmatpush.bf16.msra.mxu0 0
      %593 = vmatpush.bf16.msra.mxu0 0
      %594 = vmatpush.bf16.msra.mxu0 0
      %595 = vmatpush.bf16.msra.mxu0 0
      %596 = vmatpush.bf16.msra.mxu0 0
      %597 = vmatpush.bf16.msra.mxu0 0
      %598 = vmatpush.bf16.msra.mxu0 0
      %599 = vmatpush.bf16.msra.mxu0 %v283
      %600 = vmatmul.bf16.gmra.mxu0 %v577
      %v601 = vpop.f32.mrf.mxu0
      %v602 = vadd.f32 0.0, %v601
      %v603 = vpop.f32.mrf.mxu0
      %604 = vdwg.mxu0
      %v605 = vadd.f32 %v572, %v589
      %v606 = vadd.f32 %v573, %v602
      %607 = vrot.lane.b32.xlu0 %v412, 18
      %v608 = vpop.permute.xlu0 %607
      %v609 = vrot.slane %v608, 4
      %vm610 = vcmask 146432
      %v611 = vsel %vm610, %v609, %v608
      %v612 = vunpack.c.l.b16 %v611
      %v613 = vunpack.c.h.b16 %v611
      %v614 = vunpack.c.l.b16 0
      %v615 = vunpack.c.h.b16 0
      %vm616 = vcmp.ne.s32.totalorder %v612, %v614
      %vm617 = vcmp.ne.s32.totalorder %v613, %v615
      %vm618 = vmpackc.low %vm617, %vm616
      %v619 = vunpack.c.l.b16 %v609
      %v620 = vunpack.c.h.b16 %v609
      %v621 = vunpack.c.l.b16 0
      %v622 = vunpack.c.h.b16 0
      %vm623 = vcmp.ne.s32.totalorder %v619, %v621
      %vm624 = vcmp.ne.s32.totalorder %v620, %v622
      %vm625 = vmpackc.low %vm624, %vm623
      %v626 = vsel %vm618, %v257, 0
      %v627 = vsel %vm625, %v258, 0
      %v628 = vsel %vm618, %v259, 0
      %v629 = vsel %vm625, %v260, 0
      %s630 = scalar_lea.vmem %s2, 20
      %v631 = vld [vmem:[%s630] sm:$0xf]
      %v636 = vunpack.c.l.b16 %v626
      %v637 = vunpack.c.h.b16 %v626
      %v638 = vunpack.c.l.b16 %v627
      %v639 = vunpack.c.l.b16 %v628
      %v640 = vunpack.c.h.b16 %v628
      %v641 = vunpack.c.l.b16 %v629
      %v642 = vpack.c.b16 %v639, %v636
      %v643 = vpack.c.b16 %v640, %v637
      %v644 = vpack.c.b16 %v641, %v638
      %645 = vrot.lane.b32.xlu0 %v642, 110
      %v646 = vpop.permute.xlu0 %645
      %647 = vrot.lane.b32.xlu0 %v643, 110
      %v648 = vpop.permute.xlu0 %647
      %649 = vrot.lane.b32.xlu0 %v644, 110
      %v650 = vpop.permute.xlu0 %649
      %vm651 = vcmask 900096
      %v652 = vsel %vm651, %v646, %v648
      %v653 = vsel %vm651, %v648, %v650
      %v657 = vsel %vm286, %v631, 0
      %659 = vmatpush.bf16.msra.mxu0 0
      %660 = vmatpush.bf16.msra.mxu0 0
      %661 = vmatpush.bf16.msra.mxu0 0
      %662 = vmatpush.bf16.msra.mxu0 0
      %663 = vmatpush.bf16.msra.mxu0 0
      %664 = vmatpush.bf16.msra.mxu0 0
      %665 = vmatpush.bf16.msra.mxu0 0
      %666 = vmatpush.bf16.msra.mxu0 %v652
      %667 = vmatmul.bf16.gmra.mxu0 %v657
      %v668 = vpop.f32.mrf.mxu0
      %v669 = vadd.f32 0.0, %v668
      %v670 = vpop.f32.mrf.mxu0
      %671 = vdwg.mxu0
      %672 = vmatpush.bf16.msra.mxu0 0
      %673 = vmatpush.bf16.msra.mxu0 0
      %674 = vmatpush.bf16.msra.mxu0 0
      %675 = vmatpush.bf16.msra.mxu0 0
      %676 = vmatpush.bf16.msra.mxu0 0
      %677 = vmatpush.bf16.msra.mxu0 0
      %678 = vmatpush.bf16.msra.mxu0 0
      %679 = vmatpush.bf16.msra.mxu0 %v653
      %680 = vmatmul.bf16.gmra.mxu0 %v657
      %v681 = vpop.f32.mrf.mxu0
      %v682 = vadd.f32 0.0, %v681
      %v683 = vpop.f32.mrf.mxu0
      %684 = vdwg.mxu0
      %v685 = vadd.f32 %v605, %v669
      %v686 = vadd.f32 %v606, %v682
      %687 = vrot.lane.b32.xlu0 %v493, 32
      %v688 = vpop.permute.xlu0 %687
      %v689 = vrot.slane %v688, 4
      %vm690 = vcmask 261120
      %v691 = vsel %vm690, %v689, %v688
      %v692 = vunpack.c.l.b16 %v691
      %v693 = vunpack.c.h.b16 %v691
      %v694 = vunpack.c.l.b16 0
      %v695 = vunpack.c.h.b16 0
      %vm696 = vcmp.ne.s32.totalorder %v692, %v694
      %vm697 = vcmp.ne.s32.totalorder %v693, %v695
      %vm698 = vmpackc.low %vm697, %vm696
      %v699 = vunpack.c.l.b16 %v689
      %v700 = vunpack.c.h.b16 %v689
      %v701 = vunpack.c.l.b16 0
      %v702 = vunpack.c.h.b16 0
      %vm703 = vcmp.ne.s32.totalorder %v699, %v701
      %vm704 = vcmp.ne.s32.totalorder %v700, %v702
      %vm705 = vmpackc.low %vm704, %vm703
      %v706 = vsel %vm698, %v257, 0
      %v707 = vsel %vm705, %v258, 0
      %v708 = vsel %vm698, %v259, 0
      %v709 = vsel %vm705, %v260, 0
      %s710 = scalar_lea.vmem %s2, 24
      %v711 = vld [vmem:[%s710] sm:$0xf]
      %v716 = vunpack.c.l.b16 %v706
      %v717 = vunpack.c.h.b16 %v706
      %v718 = vunpack.c.l.b16 %v707
      %v719 = vunpack.c.l.b16 %v708
      %v720 = vunpack.c.h.b16 %v708
      %v721 = vunpack.c.l.b16 %v709
      %v722 = vpack.c.b16 %v719, %v716
      %v723 = vpack.c.b16 %v720, %v717
      %v724 = vpack.c.b16 %v721, %v718
      %725 = vrot.lane.b32.xlu0 %v722, 96
      %v726 = vpop.permute.xlu0 %725
      %727 = vrot.lane.b32.xlu0 %v723, 96
      %v728 = vpop.permute.xlu0 %727
      %729 = vrot.lane.b32.xlu0 %v724, 96
      %v730 = vpop.permute.xlu0 %729
      %vm731 = vcmask 785408
      %v732 = vsel %vm731, %v726, %v728
      %v733 = vsel %vm731, %v728, %v730
      %v737 = vsel %vm286, %v711, 0
      %739 = vmatpush.bf16.msra.mxu0 0
      %740 = vmatpush.bf16.msra.mxu0 0
      %741 = vmatpush.bf16.msra.mxu0 0
      %742 = vmatpush.bf16.msra.mxu0 0
      %743 = vmatpush.bf16.msra.mxu0 0
      %744 = vmatpush.bf16.msra.mxu0 0
      %745 = vmatpush.bf16.msra.mxu0 0
      %746 = vmatpush.bf16.msra.mxu0 %v732
      %747 = vmatmul.bf16.gmra.mxu0 %v737
      %v748 = vpop.f32.mrf.mxu0
      %v749 = vadd.f32 0.0, %v748
      %v750 = vpop.f32.mrf.mxu0
      %751 = vdwg.mxu0
      %752 = vmatpush.bf16.msra.mxu0 0
      %753 = vmatpush.bf16.msra.mxu0 0
      %754 = vmatpush.bf16.msra.mxu0 0
      %755 = vmatpush.bf16.msra.mxu0 0
      %756 = vmatpush.bf16.msra.mxu0 0
      %757 = vmatpush.bf16.msra.mxu0 0
      %758 = vmatpush.bf16.msra.mxu0 0
      %759 = vmatpush.bf16.msra.mxu0 %v733
      %760 = vmatmul.bf16.gmra.mxu0 %v737
      %v761 = vpop.f32.mrf.mxu0
      %v762 = vadd.f32 0.0, %v761
      %v763 = vpop.f32.mrf.mxu0
      %764 = vdwg.mxu0
      %v765 = vadd.f32 %v685, %v749
      %v766 = vadd.f32 %v686, %v762
      %s767 = scalar_lea.vmem %s2, 28
      %v768 = vld [vmem:[%s767] sm:$0xf]
      %769 = vrot.lane.b32.xlu0 %v272, 95
      %v770 = vpop.permute.xlu0 %769
      %771 = vrot.lane.b32.xlu0 %v273, 95
      %v772 = vpop.permute.xlu0 %771
      %773 = vrot.lane.b32.xlu0 %v274, 95
      %v774 = vpop.permute.xlu0 %773
      %vm775 = vcmask 777216
      %v776 = vsel %vm775, %v770, %v772
      %v777 = vsel %vm775, %v772, %v774
      %v781 = vsel %vm286, %v768, 0
      %783 = vmatpush.bf16.msra.mxu0 0
      %784 = vmatpush.bf16.msra.mxu0 0
      %785 = vmatpush.bf16.msra.mxu0 0
      %786 = vmatpush.bf16.msra.mxu0 0
      %787 = vmatpush.bf16.msra.mxu0 0
      %788 = vmatpush.bf16.msra.mxu0 0
      %789 = vmatpush.bf16.msra.mxu0 0
      %790 = vmatpush.bf16.msra.mxu0 %v776
      %791 = vmatmul.bf16.gmra.mxu0 %v781
      %v792 = vpop.f32.mrf.mxu0
      %v793 = vadd.f32 0.0, %v792
      %v794 = vpop.f32.mrf.mxu0
      %795 = vdwg.mxu0
      %796 = vmatpush.bf16.msra.mxu0 0
      %797 = vmatpush.bf16.msra.mxu0 0
      %798 = vmatpush.bf16.msra.mxu0 0
      %799 = vmatpush.bf16.msra.mxu0 0
      %800 = vmatpush.bf16.msra.mxu0 0
      %801 = vmatpush.bf16.msra.mxu0 0
      %802 = vmatpush.bf16.msra.mxu0 0
      %803 = vmatpush.bf16.msra.mxu0 %v777
      %804 = vmatmul.bf16.gmra.mxu0 %v781
      %v805 = vpop.f32.mrf.mxu0
      %v806 = vadd.f32 0.0, %v805
      %v807 = vpop.f32.mrf.mxu0
      %808 = vdwg.mxu0
      %v809 = vadd.f32 %v765, %v793
      %v810 = vadd.f32 %v766, %v806
      %811 = vrot.lane.b32.xlu0 %v412, 34
      %v812 = vpop.permute.xlu0 %811
      %v813 = vrot.slane %v812, 4
      %vm814 = vcmask 277504
      %v815 = vsel %vm814, %v813, %v812
      %v816 = vunpack.c.l.b16 %v815
      %v817 = vunpack.c.h.b16 %v815
      %v818 = vunpack.c.l.b16 0
      %v819 = vunpack.c.h.b16 0
      %vm820 = vcmp.ne.s32.totalorder %v816, %v818
      %vm821 = vcmp.ne.s32.totalorder %v817, %v819
      %vm822 = vmpackc.low %vm821, %vm820
      %v823 = vunpack.c.l.b16 %v813
      %v824 = vunpack.c.h.b16 %v813
      %v825 = vunpack.c.l.b16 0
      %v826 = vunpack.c.h.b16 0
      %vm827 = vcmp.ne.s32.totalorder %v823, %v825
      %vm828 = vcmp.ne.s32.totalorder %v824, %v826
      %vm829 = vmpackc.low %vm828, %vm827
      %v830 = vsel %vm822, %v257, 0
      %v831 = vsel %vm829, %v258, 0
      %v832 = vsel %vm822, %v259, 0
      %v833 = vsel %vm829, %v260, 0
      %s834 = scalar_lea.vmem %s2, 32
      %v835 = vld [vmem:[%s834] sm:$0xf]
      %v840 = vunpack.c.l.b16 %v830
      %v841 = vunpack.c.h.b16 %v830
      %v842 = vunpack.c.l.b16 %v831
      %v843 = vunpack.c.l.b16 %v832
      %v844 = vunpack.c.h.b16 %v832
      %v845 = vunpack.c.l.b16 %v833
      %v846 = vpack.c.b16 %v843, %v840
      %v847 = vpack.c.b16 %v844, %v841
      %v848 = vpack.c.b16 %v845, %v842
      %849 = vrot.lane.b32.xlu0 %v846, 94
      %v850 = vpop.permute.xlu0 %849
      %851 = vrot.lane.b32.xlu0 %v847, 94
      %v852 = vpop.permute.xlu0 %851
      %853 = vrot.lane.b32.xlu0 %v848, 94
      %v854 = vpop.permute.xlu0 %853
      %vm855 = vcmask 769024
      %v856 = vsel %vm855, %v850, %v852
      %v857 = vsel %vm855, %v852, %v854
      %v861 = vsel %vm286, %v835, 0
      %863 = vmatpush.bf16.msra.mxu0 0
      %864 = vmatpush.bf16.msra.mxu0 0
      %865 = vmatpush.bf16.msra.mxu0 0
      %866 = vmatpush.bf16.msra.mxu0 0
      %867 = vmatpush.bf16.msra.mxu0 0
      %868 = vmatpush.bf16.msra.mxu0 0
      %869 = vmatpush.bf16.msra.mxu0 0
      %870 = vmatpush.bf16.msra.mxu0 %v856
      %871 = vmatmul.bf16.gmra.mxu0 %v861
      %v872 = vpop.f32.mrf.mxu0
      %v873 = vadd.f32 0.0, %v872
      %v874 = vpop.f32.mrf.mxu0
      %875 = vdwg.mxu0
      %876 = vmatpush.bf16.msra.mxu0 0
      %877 = vmatpush.bf16.msra.mxu0 0
      %878 = vmatpush.bf16.msra.mxu0 0
      %879 = vmatpush.bf16.msra.mxu0 0
      %880 = vmatpush.bf16.msra.mxu0 0
      %881 = vmatpush.bf16.msra.mxu0 0
      %882 = vmatpush.bf16.msra.mxu0 0
      %883 = vmatpush.bf16.msra.mxu0 %v857
      %884 = vmatmul.bf16.gmra.mxu0 %v861
      %v885 = vpop.f32.mrf.mxu0
      %v886 = vadd.f32 0.0, %v885
      %v887 = vpop.f32.mrf.mxu0
      %888 = vdwg.mxu0
      %v889 = vadd.f32 %v809, %v873
      %v890 = vadd.f32 %v810, %v886
      %v891 = vadd.f32 %v300, %v313
      %892 = vadd.xlane.f32.xlu0 %v891
      %v893 = vpop.xlane.xlu0 %892
      %v894 = vadd.f32 %v889, %v890
      %895 = vadd.xlane.f32.xlu0 %v894
      %v896 = vpop.xlane.xlu0 %895
      %vm897 = vcmask 7168
      %898 = vst.msk [vmem:[%s210] sm:$0xff] %vm897, %v893
      %899 = vst.msk [vmem:[%s210 + $0x8] sm:$0xff] %vm897, %v896
      %v900 = vmul.f32 %v300, %v300
      %v901 = vmul.f32 %v313, %v313
      %v902 = vmul.f32 %v889, %v889
      %v903 = vmul.f32 %v890, %v890
      %v904 = vadd.f32 %v900, %v901
      %905 = vadd.xlane.f32.xlu0 %v904
      %v906 = vpop.xlane.xlu0 %905
      %v907 = vadd.f32 %v902, %v903
      %908 = vadd.xlane.f32.xlu0 %v907
      %v909 = vpop.xlane.xlu0 %908
      %vm910 = vcmask 15368
      %911 = vst.msk [vmem:[%s210] sm:$0xff] %vm910, %v906
      %912 = vst.msk [vmem:[%s210 + $0x8] sm:$0xff] %vm910, %v909
      %v913 = vpack.c.bf16 %v313, %v300
      %v914 = vpack.c.bf16 %v890, %v889
      %915 = vst [vmem:[%s205] sm:$0xff] %v913
      %916 = vst [vmem:[%s205 + $0x8] sm:$0xff] %v914
      %p917 = scmp.lt.s32.totalorder %s16, 1
      %s918 = scalar_select %p917, %s16, 1
      %s919 = smul.addr %s918, 4
      %s920 = smul.addr %s919, 4
      %s921 = scalar_lea.vmem %s3, %s920
      %p922 = scmp.lt.s32.totalorder %s16, 1
      %s923 = scalar_select %p922, %s16, 1
      %s924 = smul.addr %s923, 2
      %s925 = smul.addr %s924, 8
      %s926 = scalar_lea.vmem %s4, %s925
      // Predicated region
      $region33: #{mixconv_forward.2} parent=31 // pred_check
        %p927 = pneg %p102
      $region34: #{mixconv_forward.2} parent=31 // pred_check_branch
        %929 = sbr.rel (%p927) target = $region36
      $region35: #{mixconv_forward.2} parent=31 // pred_region
        _
      $region36: #{mixconv_forward.2} parent=31 // pred_fallthru
        _
      // Predicated region
      $region37: #{mixconv_forward.2} parent=31 // pred_check
        %p930 = pneg %p128
      $region38: #{mixconv_forward.2} parent=31 // pred_check_branch
        %932 = sbr.rel (%p930) target = $region40
      $region39: #{mixconv_forward.2} parent=31 // pred_region
        _
      $region40: #{mixconv_forward.2} parent=31 // pred_fallthru
        _
    $region32: #{mixconv_forward.2} parent=5 // pred_fallthru
      _
    %p933 = scmp.le.s32.totalorder 2, %s11
    // Predicated region
    $region41: #{mixconv_forward.2} parent=5 // pred_check
      %p934 = pneg %p933
    $region42: #{mixconv_forward.2} parent=5 // pred_check_branch
      %936 = sbr.rel (%p934) target = $region44
    $region43: #{mixconv_forward.2} parent=5 // pred_region
      %s937 = ssub.s32 %s11, 2
      // Predicated region
      $region45: #{mixconv_forward.2} parent=43 // pred_check
        %p938 = pneg %p108
      $region46: #{mixconv_forward.2} parent=43 // pred_check_branch
        %940 = sbr.rel (%p938) target = $region48
      $region47: #{mixconv_forward.2} parent=43 // pred_region
        %p941 = scmp.lt.s32.totalorder %s17, 1
        %s942 = scalar_select %p941, %s17, 1
        %s943 = smul.addr %s942, 4
        %s944 = smul.addr %s943, 4
        %s945 = scalar_lea.vmem %s3, %s944
      $region48: #{mixconv_forward.2} parent=43 // pred_fallthru
        _
      // Predicated region
      $region49: #{mixconv_forward.2} parent=43 // pred_check
        %p946 = pneg %p134
      $region50: #{mixconv_forward.2} parent=43 // pred_check_branch
        %948 = sbr.rel (%p946) target = $region52
      $region51: #{mixconv_forward.2} parent=43 // pred_region
        %p949 = scmp.lt.s32.totalorder %s17, 1
        %s950 = scalar_select %p949, %s17, 1
        %s951 = smul.addr %s950, 2
        %s952 = smul.addr %s951, 8
        %s953 = scalar_lea.vmem %s4, %s952
      $region52: #{mixconv_forward.2} parent=43 // pred_fallthru
        _
    $region44: #{mixconv_forward.2} parent=5 // pred_fallthru
      _
  $region6: #{mixconv_forward.2} parent=0 // loop_footer
    %s15 = sadd.s32 1, %s11
  $region7: #{mixconv_forward.2} parent=0 // loop_footer_branch
    %10 = sbr.rel target = $region3
  $region8: #{mixconv_forward.2} parent=0 // loop_exit
    _

</llo_original>
